<compile_context>
chip_gen: v5e
topology: v5e:2x2
jax: 0.10.0
libtpu: 0.0.40
codegen_flags: <defaults>
</compile_context>

<pallas_src>
import functools

import jax
import jax.numpy as jnp
from jax import lax
from jax.experimental import pallas as pl
from jax.experimental.pallas import tpu as pltpu


def _round_up(x, m):
    return (x + m - 1) // m * m


def _num_parallel_cores():
    """Best-effort TensorCore-per-chip count (2 on v7x-style megacore parts)."""
    try:
        kind = jax.devices()[0].device_kind.lower()
        if "v7" in kind:
            return 2
    except Exception:
        pass
    return 1


# --------------------------------------------------------------------------- #
# Fused kernel: per-chunk input projection (time-parallel) + LSTM recurrence.  #
# --------------------------------------------------------------------------- #
def fused_lstm_kernel(emb_ref, wih_ref, whh_ref, b_ref, h_ref, c_ref, xp_ref,
                      *, t_total, mask_tail, unroll):
    # emb_ref : (TC, BB, D)   bf16  embedded tokens for this T-chunk (streamed)
    # wih_ref : (D, 4H)       bf16  input->gates weights   (grid-resident)
    # whh_ref : (H, 4H)       bf16  hidden->gates weights  (grid-resident)
    # b_ref   : (1, 4H)       f32   b_ih + b_hh            (grid-resident)
    # h_ref   : (BB, H)       f32   running / final hidden state (resident accumulator)
    # c_ref   : (BB, H)       f32   running / final cell   state (resident accumulator)
    # xp_ref  : (TC*BB, 4H)   f32   VMEM scratch: chunk input projection
    c_idx = pl.program_id(1)
    TC, BB, D = emb_ref.shape
    H = whh_ref.shape[0]

    @pl.when(c_idx == 0)
    def _():
        h_ref[...] = jnp.zeros_like(h_ref)
        c_ref[...] = jnp.zeros_like(c_ref)

    # ---- Time-parallel input projection for the whole chunk (one MXU matmul,
    # off the serial h->h path): (TC*BB, D) @ (D, 4H) + b  -> f32 scratch.
    emb2d = emb_ref[...].reshape(TC * BB, D)
    xp_ref[...] = (
        jnp.dot(emb2d, wih_ref[...], preferred_element_type=jnp.float32)
        + b_ref[...]
    )

    whh = whh_ref[...]            # load the recurrent weights ONCE per chunk
    h0 = h_ref[...]
    c0 = c_ref[...]

    def step(t, carry):
        h, c = carry
        row = pl.multiple_of(t * BB, 8)
        gates = xp_ref[pl.ds(row, BB), :] + jnp.dot(
            h.astype(whh.dtype), whh, preferred_element_type=jnp.float32
        )                                                   # (BB, 4H) f32
        i_g = jax.nn.sigmoid(gates[:, 0 * H:1 * H])
        f_g = jax.nn.sigmoid(gates[:, 1 * H:2 * H])
        g_g = jnp.tanh(gates[:, 2 * H:3 * H])
        o_g = jax.nn.sigmoid(gates[:, 3 * H:4 * H])
        c_new = f_g * c + i_g * g_g
        h_new = o_g * jnp.tanh(c_new)
        if mask_tail:  # static flag: only emitted when T % TC != 0
            valid = (c_idx * TC + t) < t_total
            h_new = jnp.where(valid, h_new, h)
            c_new = jnp.where(valid, c_new, c)
        return h_new, c_new

    h_fin, c_fin = lax.fori_loop(0, TC, step, (h0, c0), unroll=unroll)
    h_ref[...] = h_fin
    c_ref[...] = c_fin


# --------------------------------------------------------------------------- #
# Wrapper                                                                      #
# --------------------------------------------------------------------------- #
def model_forward(X, params):
    """Eval-mode forward matching PyTorch Model.forward (n_layers=1, batch_first)."""
    emb_table = params["embedding"]                     # (V, D)
    w_ih = params["w_ih"]                               # (4H, D) PyTorch layout
    w_hh = params["w_hh"]                               # (4H, H)
    bias = (params["b_ih"] + params["b_hh"]).astype(jnp.float32)   # (4H,)
    w_out = params["w_out"]                             # (1, H)
    b_out = params["b_out"]                             # (1,)

    B, T = X.shape
    D = emb_table.shape[1]
    H = w_hh.shape[1]
    G = 4 * H

    # ---- Batch blocking. On 2-TC chips split the batch so the "parallel" grid
    # axis has >= 2 blocks (megacore sharding); on 1-TC chips keep BB maximal.
    n_cores = _num_parallel_cores()
    if B > 128:
        BB = 128
    elif n_cores > 1 and B >= 16:
        BB = _round_up(-(-B // n_cores), 8)
    else:
        BB = _round_up(B, 8)
    B_pad = _round_up(B, BB)

    # ---- Timesteps per chunk from a VMEM budget: emb double-buffer (bf16) +
    # f32 projection scratch + matmul temporary; keeps the call well under the
    # 32 MiB scoped VMEM limit on every generation.
    per_t_bytes = 2 * BB * D * 2 + 2 * BB * G * 4
    TC = int(max(1, min(64, (10 * 1024 * 1024) // per_t_bytes, T)))
    T_pad = _round_up(T, TC)

    # ---- Embedding gather (bf16 halves HBM traffic). Dropouts are identity in eval.
    # TODO(synk): fuse the gather into the kernel (scalar-prefetched ids + row DMA
    # from an ANY-space table) to remove this HBM-materialized intermediate.
    X_p = jnp.pad(X, ((0, B_pad - B), (0, 0)))          # pad batch with token id 0
    X_tm = jnp.transpose(X_p)                           # (T, B_pad) — tiny int transpose
    emb_tm = jnp.take(emb_table.astype(jnp.bfloat16), X_tm, axis=0)  # (T, B_pad, D)
    if T_pad != T:
        emb_tm = jnp.pad(emb_tm, ((0, T_pad - T), (0, 0), (0, 0)))

    w_ih_t = jnp.transpose(w_ih).astype(jnp.bfloat16)   # (D, 4H)
    w_hh_t = jnp.transpose(w_hh).astype(jnp.bfloat16)   # (H, 4H)
    b2 = bias.reshape(1, G)

    # vreg-pressure-aware unroll: full-ish for small batch blocks, small otherwise.
    unroll = int(min(TC, 8)) if BB <= 32 else int(min(TC, 4))
    kernel = functools.partial(
        fused_lstm_kernel, t_total=T, mask_tail=(T_pad != T), unroll=unroll)

    h_fin, c_fin = pl.pallas_call(
        kernel,
        out_shape=(
            jax.ShapeDtypeStruct((B_pad, H), jnp.float32),
            jax.ShapeDtypeStruct((B_pad, H), jnp.float32),
        ),
        grid_spec=pltpu.PrefetchScalarGridSpec(
            num_scalar_prefetch=0,
            grid=(B_pad // BB, T_pad // TC),
            in_specs=[
                pl.BlockSpec((TC, BB, D), lambda b, c: (c, b, 0)),   # emb stream
                pl.BlockSpec((D, G), lambda b, c: (0, 0)),           # W_ih^T resident
                pl.BlockSpec((H, G), lambda b, c: (0, 0)),           # W_hh^T resident
                pl.BlockSpec((1, G), lambda b, c: (0, 0)),           # bias resident
            ],
            out_specs=[
                pl.BlockSpec((BB, H), lambda b, c: (b, 0)),
                pl.BlockSpec((BB, H), lambda b, c: (b, 0)),
            ],
            scratch_shapes=[pltpu.VMEM((TC * BB, G), jnp.float32)],
        ),
        compiler_params=pltpu.CompilerParams(
            dimension_semantics=("parallel", "arbitrary"),
            vmem_limit_bytes=32 * 1024 * 1024),
    )(emb_tm, w_ih_t, w_hh_t, b2)

    # ---- Output head on the final hidden state (tiny (B,H)@(H,1) — lane-sparse,
    # left to XLA).  output_layer(raw_out)[:, -1, 0] == head applied to h_T.
    h_valid = h_fin[:B]                                 # (B, H)
    c_valid = c_fin[:B]
    logits = jnp.dot(h_valid, jnp.transpose(w_out).astype(jnp.float32)) + b_out
    final_output = logits[:, 0]
    hidden = h_valid[None, :, :]                        # torch.cat(new_hidden, 0) -> (1, B, H)
    cell_state = c_valid[None, :, :]                    # (1, B, H)
    return final_output, hidden, cell_state


def init_params(key, nb_words, embedding_size, hidden_size):
    k = jax.random.split(key, 7)
    initrange = 0.1
    stdv = 1.0 / jnp.sqrt(hidden_size)
    params = {
        # Model.init_weights: embedding uniform(-0.1, 0.1)
        "embedding": jax.random.uniform(k[0], (nb_words, embedding_size),
                                        minval=-initrange, maxval=initrange),
        # PyTorch LSTM default init: uniform(-1/sqrt(H), 1/sqrt(H))
        "w_ih": jax.random.uniform(k[1], (4 * hidden_size, embedding_size),
                                   minval=-stdv, maxval=stdv),
        "w_hh": jax.random.uniform(k[2], (4 * hidden_size, hidden_size),
                                   minval=-stdv, maxval=stdv),
        "b_ih": jax.random.uniform(k[3], (4 * hidden_size,),
                                   minval=-stdv, maxval=stdv),
        "b_hh": jax.random.uniform(k[4], (4 * hidden_size,),
                                   minval=-stdv, maxval=stdv),
        # output_layer: weight uniform(-0.1, 0.1), bias = 0
        "w_out": jax.random.uniform(k[5], (1, hidden_size),
                                    minval=-initrange, maxval=initrange),
        "b_out": jnp.zeros((1,), jnp.float32),
    }
    return jax.tree_util.tree_map(lambda a: a.astype(jnp.float32), params)


if __name__ == "__main__":
    nb_words = 100
    embedding_size = 128    # module default
    hidden_size = 128       # module default (keeps gate slices lane-aligned)
    batch = 8
    seq = 8

    key = jax.random.PRNGKey(0)
    k_param, k_tok = jax.random.split(key)
    params = init_params(k_param, nb_words, embedding_size, hidden_size)
    X = jax.random.randint(k_tok, (batch, seq), 0, nb_words, dtype=jnp.int32)

    fwd = jax.jit(model_forward)
    final_output, hidden, cell_state = fwd(X, params)
    jax.block_until_ready((final_output, hidden, cell_state))

    assert final_output.shape == (batch,)
    assert hidden.shape == (1, batch, hidden_size)
    assert cell_state.shape == (1, batch, hidden_size)
    print("KERNEL_OK")
</pallas_src>

<mosaic_0001>
module attributes {stable_mosaic.version = 11 : i64} {
  func.func @fused_lstm_kernel(%arg0: i32, %arg1: i32, %arg2: memref<8x8x128xbf16, #tpu.memory_space<vmem>>, %arg3: memref<128x512xbf16, #tpu.memory_space<vmem>>, %arg4: memref<128x512xbf16, #tpu.memory_space<vmem>>, %arg5: memref<1x512xf32, #tpu.memory_space<vmem>>, %arg6: memref<8x128xf32, #tpu.memory_space<vmem>>, %arg7: memref<8x128xf32, #tpu.memory_space<vmem>>, %arg8: memref<64x512xf32, #tpu.memory_space<vmem>>) attributes {dimension_semantics = [#tpu.dimension_semantics<parallel>, #tpu.dimension_semantics<arbitrary>], iteration_bounds = array<i64: 1, 1>, scalar_prefetch = 0 : i64, scratch_operands = 1 : i64, tpu.core_type = #tpu.core_type<tc>, window_params = [{transform_indices = @transform_0, window_bounds = array<i64: 8, 8, 128>}, {pipeline_mode = #tpu.pipeline_mode<synchronous>, transform_indices = @transform_1, window_bounds = array<i64: 128, 512>}, {pipeline_mode = #tpu.pipeline_mode<synchronous>, transform_indices = @transform_2, window_bounds = array<i64: 128, 512>}, {pipeline_mode = #tpu.pipeline_mode<synchronous>, transform_indices = @transform_3, window_bounds = array<i64: 1, 512>}, {transform_indices = @transform_4, window_bounds = array<i64: 8, 128>}, {transform_indices = @transform_5, window_bounds = array<i64: 8, 128>}]} {
    %c0_i32 = arith.constant 0 : i32
    %0 = arith.cmpi eq, %arg1, %c0_i32 : i32
    %1 = arith.extui %0 : i1 to i32
    %c0_i32_0 = arith.constant 0 : i32
    %2 = arith.cmpi ne, %1, %c0_i32_0 : i32
    scf.if %2 {
      %cst_68 = arith.constant 0.000000e+00 : f32
      %272 = vector.broadcast %cst_68 : f32 to vector<8x128xf32>
      %c0_69 = arith.constant 0 : index
      %c0_70 = arith.constant 0 : index
      %273 = vector.load %arg6[%c0_69, %c0_70] : memref<8x128xf32, #tpu.memory_space<vmem>>, vector<8x128xf32>
      tpu.vector_store %arg6[%c0_69, %c0_70], %272 {strides = array<i32>} : memref<8x128xf32, #tpu.memory_space<vmem>>, vector<8x128xf32>,
      %cst_71 = arith.constant 0.000000e+00 : f32
      %274 = vector.broadcast %cst_71 : f32 to vector<8x128xf32>
      %c0_72 = arith.constant 0 : index
      %c0_73 = arith.constant 0 : index
      %275 = vector.load %arg7[%c0_72, %c0_73] : memref<8x128xf32, #tpu.memory_space<vmem>>, vector<8x128xf32>
      tpu.vector_store %arg7[%c0_72, %c0_73], %274 {strides = array<i32>} : memref<8x128xf32, #tpu.memory_space<vmem>>, vector<8x128xf32>,
    } else {
    }
    %c0 = arith.constant 0 : index
    %c0_1 = arith.constant 0 : index
    %c0_2 = arith.constant 0 : index
    %3 = vector.load %arg2[%c0, %c0_1, %c0_2] : memref<8x8x128xbf16, #tpu.memory_space<vmem>>, vector<8x8x128xbf16>
    %4 = vector.shape_cast %3 : vector<8x8x128xbf16> to vector<64x128xbf16>
    %c0_3 = arith.constant 0 : index
    %c0_4 = arith.constant 0 : index
    %5 = vector.load %arg3[%c0_3, %c0_4] : memref<128x512xbf16, #tpu.memory_space<vmem>>, vector<128x512xbf16>
    %cst = arith.constant dense<0.000000e+00> : vector<64x512xf32>
    %6 = tpu.matmul %4, %5, %cst {dimension_numbers = #tpu.dot_dimension_numbers<[1], [0], [0], [1], [0, 0, 1, 1], [], []>} : vector<64x128xbf16>, vector<128x512xbf16>, vector<64x512xf32> -> vector<64x512xf32>
    %c0_5 = arith.constant 0 : index
    %c0_6 = arith.constant 0 : index
    %7 = vector.load %arg5[%c0_5, %c0_6] : memref<1x512xf32, #tpu.memory_space<vmem>>, vector<1x512xf32>
    %8 = vector.broadcast %7 : vector<1x512xf32> to vector<64x512xf32>
    %9 = arith.addf %6, %8 : vector<64x512xf32>
    %c0_7 = arith.constant 0 : index
    %c0_8 = arith.constant 0 : index
    %10 = vector.load %arg8[%c0_7, %c0_8] : memref<64x512xf32, #tpu.memory_space<vmem>>, vector<64x512xf32>
    tpu.vector_store %arg8[%c0_7, %c0_8], %9 {strides = array<i32>} : memref<64x512xf32, #tpu.memory_space<vmem>>, vector<64x512xf32>,
    %c0_9 = arith.constant 0 : index
    %c0_10 = arith.constant 0 : index
    %11 = vector.load %arg4[%c0_9, %c0_10] : memref<128x512xbf16, #tpu.memory_space<vmem>>, vector<128x512xbf16>
    %c0_11 = arith.constant 0 : index
    %c0_12 = arith.constant 0 : index
    %12 = vector.load %arg6[%c0_11, %c0_12] : memref<8x128xf32, #tpu.memory_space<vmem>>, vector<8x128xf32>
    %c0_13 = arith.constant 0 : index
    %c0_14 = arith.constant 0 : index
    %13 = vector.load %arg7[%c0_13, %c0_14] : memref<8x128xf32, #tpu.memory_space<vmem>>, vector<8x128xf32>
    %c0_i32_15 = arith.constant 0 : i32
    %c8_i32 = arith.constant 8 : i32
    %14 = arith.muli %c0_i32_15, %c8_i32 : i32
    %15 = tpu.assume_multiple %14, 8 : i32
    %16 = arith.index_cast %15 : i32 to index
    %c0_16 = arith.constant 0 : index
    %17 = vector.load %arg8[%16, %c0_16] : memref<64x512xf32, #tpu.memory_space<vmem>>, vector<8x512xf32>
    %18 = arith.truncf %12 : vector<8x128xf32> to vector<8x128xbf16>
    %cst_17 = arith.constant dense<0.000000e+00> : vector<8x512xf32>
    %19 = tpu.matmul %18, %11, %cst_17 {dimension_numbers = #tpu.dot_dimension_numbers<[1], [0], [0], [1], [0, 0, 1, 1], [], []>} : vector<8x128xbf16>, vector<128x512xbf16>, vector<8x512xf32> -> vector<8x512xf32>
    %20 = arith.addf %17, %19 : vector<8x512xf32>
    %21 = vector.extract_strided_slice %20 {offsets = [0, 0], sizes = [8, 128], strides = [1, 1]} : vector<8x512xf32> to vector<8x128xf32>
    %22 = arith.negf %21 : vector<8x128xf32>
    %23 = math.exp %22 : vector<8x128xf32>
    %cst_18 = arith.constant 1.000000e+00 : f32
    %24 = vector.broadcast %cst_18 : f32 to vector<8x128xf32>
    %25 = arith.addf %24, %23 : vector<8x128xf32>
    %26 = arith.divf %24, %25 : vector<8x128xf32>
    %27 = vector.extract_strided_slice %20 {offsets = [0, 128], sizes = [8, 128], strides = [1, 1]} : vector<8x512xf32> to vector<8x128xf32>
    %28 = arith.negf %27 : vector<8x128xf32>
    %29 = math.exp %28 : vector<8x128xf32>
    %cst_19 = arith.constant 1.000000e+00 : f32
    %30 = vector.broadcast %cst_19 : f32 to vector<8x128xf32>
    %31 = arith.addf %30, %29 : vector<8x128xf32>
    %32 = arith.divf %30, %31 : vector<8x128xf32>
    %33 = vector.extract_strided_slice %20 {offsets = [0, 256], sizes = [8, 128], strides = [1, 1]} : vector<8x512xf32> to vector<8x128xf32>
    %34 = math.tanh %33 : vector<8x128xf32>
    %35 = vector.extract_strided_slice %20 {offsets = [0, 384], sizes = [8, 128], strides = [1, 1]} : vector<8x512xf32> to vector<8x128xf32>
    %36 = arith.negf %35 : vector<8x128xf32>
    %37 = math.exp %36 : vector<8x128xf32>
    %cst_20 = arith.constant 1.000000e+00 : f32
    %38 = vector.broadcast %cst_20 : f32 to vector<8x128xf32>
    %39 = arith.addf %38, %37 : vector<8x128xf32>
    %40 = arith.divf %38, %39 : vector<8x128xf32>
    %41 = arith.mulf %32, %13 : vector<8x128xf32>
    %42 = arith.mulf %26, %34 : vector<8x128xf32>
    %43 = arith.addf %41, %42 : vector<8x128xf32>
    %44 = math.tanh %43 : vector<8x128xf32>
    %45 = arith.mulf %40, %44 : vector<8x128xf32>
    %c1_i32 = arith.constant 1 : i32
    %c8_i32_21 = arith.constant 8 : i32
    %46 = arith.muli %c1_i32, %c8_i32_21 : i32
    %47 = tpu.assume_multiple %46, 8 : i32
    %48 = arith.index_cast %47 : i32 to index
    %c0_22 = arith.constant 0 : index
    %49 = vector.load %arg8[%48, %c0_22] : memref<64x512xf32, #tpu.memory_space<vmem>>, vector<8x512xf32>
    %50 = arith.truncf %45 : vector<8x128xf32> to vector<8x128xbf16>
    %cst_23 = arith.constant dense<0.000000e+00> : vector<8x512xf32>
    %51 = tpu.matmul %50, %11, %cst_23 {dimension_numbers = #tpu.dot_dimension_numbers<[1], [0], [0], [1], [0, 0, 1, 1], [], []>} : vector<8x128xbf16>, vector<128x512xbf16>, vector<8x512xf32> -> vector<8x512xf32>
    %52 = arith.addf %49, %51 : vector<8x512xf32>
    %53 = vector.extract_strided_slice %52 {offsets = [0, 0], sizes = [8, 128], strides = [1, 1]} : vector<8x512xf32> to vector<8x128xf32>
    %54 = arith.negf %53 : vector<8x128xf32>
    %55 = math.exp %54 : vector<8x128xf32>
    %cst_24 = arith.constant 1.000000e+00 : f32
    %56 = vector.broadcast %cst_24 : f32 to vector<8x128xf32>
    %57 = arith.addf %56, %55 : vector<8x128xf32>
    %58 = arith.divf %56, %57 : vector<8x128xf32>
    %59 = vector.extract_strided_slice %52 {offsets = [0, 128], sizes = [8, 128], strides = [1, 1]} : vector<8x512xf32> to vector<8x128xf32>
    %60 = arith.negf %59 : vector<8x128xf32>
    %61 = math.exp %60 : vector<8x128xf32>
    %cst_25 = arith.constant 1.000000e+00 : f32
    %62 = vector.broadcast %cst_25 : f32 to vector<8x128xf32>
    %63 = arith.addf %62, %61 : vector<8x128xf32>
    %64 = arith.divf %62, %63 : vector<8x128xf32>
    %65 = vector.extract_strided_slice %52 {offsets = [0, 256], sizes = [8, 128], strides = [1, 1]} : vector<8x512xf32> to vector<8x128xf32>
    %66 = math.tanh %65 : vector<8x128xf32>
    %67 = vector.extract_strided_slice %52 {offsets = [0, 384], sizes = [8, 128], strides = [1, 1]} : vector<8x512xf32> to vector<8x128xf32>
    %68 = arith.negf %67 : vector<8x128xf32>
    %69 = math.exp %68 : vector<8x128xf32>
    %cst_26 = arith.constant 1.000000e+00 : f32
    %70 = vector.broadcast %cst_26 : f32 to vector<8x128xf32>
    %71 = arith.addf %70, %69 : vector<8x128xf32>
    %72 = arith.divf %70, %71 : vector<8x128xf32>
    %73 = arith.mulf %64, %43 : vector<8x128xf32>
    %74 = arith.mulf %58, %66 : vector<8x128xf32>
    %75 = arith.addf %73, %74 : vector<8x128xf32>
    %76 = math.tanh %75 : vector<8x128xf32>
    %77 = arith.mulf %72, %76 : vector<8x128xf32>
    %c2_i32 = arith.constant 2 : i32
    %c8_i32_27 = arith.constant 8 : i32
    %78 = arith.muli %c2_i32, %c8_i32_27 : i32
    %79 = tpu.assume_multiple %78, 8 : i32
    %80 = arith.index_cast %79 : i32 to index
    %c0_28 = arith.constant 0 : index
    %81 = vector.load %arg8[%80, %c0_28] : memref<64x512xf32, #tpu.memory_space<vmem>>, vector<8x512xf32>
    %82 = arith.truncf %77 : vector<8x128xf32> to vector<8x128xbf16>
    %cst_29 = arith.constant dense<0.000000e+00> : vector<8x512xf32>
    %83 = tpu.matmul %82, %11, %cst_29 {dimension_numbers = #tpu.dot_dimension_numbers<[1], [0], [0], [1], [0, 0, 1, 1], [], []>} : vector<8x128xbf16>, vector<128x512xbf16>, vector<8x512xf32> -> vector<8x512xf32>
    %84 = arith.addf %81, %83 : vector<8x512xf32>
    %85 = vector.extract_strided_slice %84 {offsets = [0, 0], sizes = [8, 128], strides = [1, 1]} : vector<8x512xf32> to vector<8x128xf32>
    %86 = arith.negf %85 : vector<8x128xf32>
    %87 = math.exp %86 : vector<8x128xf32>
    %cst_30 = arith.constant 1.000000e+00 : f32
    %88 = vector.broadcast %cst_30 : f32 to vector<8x128xf32>
    %89 = arith.addf %88, %87 : vector<8x128xf32>
    %90 = arith.divf %88, %89 : vector<8x128xf32>
    %91 = vector.extract_strided_slice %84 {offsets = [0, 128], sizes = [8, 128], strides = [1, 1]} : vector<8x512xf32> to vector<8x128xf32>
    %92 = arith.negf %91 : vector<8x128xf32>
    %93 = math.exp %92 : vector<8x128xf32>
    %cst_31 = arith.constant 1.000000e+00 : f32
    %94 = vector.broadcast %cst_31 : f32 to vector<8x128xf32>
    %95 = arith.addf %94, %93 : vector<8x128xf32>
    %96 = arith.divf %94, %95 : vector<8x128xf32>
    %97 = vector.extract_strided_slice %84 {offsets = [0, 256], sizes = [8, 128], strides = [1, 1]} : vector<8x512xf32> to vector<8x128xf32>
    %98 = math.tanh %97 : vector<8x128xf32>
    %99 = vector.extract_strided_slice %84 {offsets = [0, 384], sizes = [8, 128], strides = [1, 1]} : vector<8x512xf32> to vector<8x128xf32>
    %100 = arith.negf %99 : vector<8x128xf32>
    %101 = math.exp %100 : vector<8x128xf32>
    %cst_32 = arith.constant 1.000000e+00 : f32
    %102 = vector.broadcast %cst_32 : f32 to vector<8x128xf32>
    %103 = arith.addf %102, %101 : vector<8x128xf32>
    %104 = arith.divf %102, %103 : vector<8x128xf32>
    %105 = arith.mulf %96, %75 : vector<8x128xf32>
    %106 = arith.mulf %90, %98 : vector<8x128xf32>
    %107 = arith.addf %105, %106 : vector<8x128xf32>
    %108 = math.tanh %107 : vector<8x128xf32>
    %109 = arith.mulf %104, %108 : vector<8x128xf32>
    %c3_i32 = arith.constant 3 : i32
    %c8_i32_33 = arith.constant 8 : i32
    %110 = arith.muli %c3_i32, %c8_i32_33 : i32
    %111 = tpu.assume_multiple %110, 8 : i32
    %112 = arith.index_cast %111 : i32 to index
    %c0_34 = arith.constant 0 : index
    %113 = vector.load %arg8[%112, %c0_34] : memref<64x512xf32, #tpu.memory_space<vmem>>, vector<8x512xf32>
    %114 = arith.truncf %109 : vector<8x128xf32> to vector<8x128xbf16>
    %cst_35 = arith.constant dense<0.000000e+00> : vector<8x512xf32>
    %115 = tpu.matmul %114, %11, %cst_35 {dimension_numbers = #tpu.dot_dimension_numbers<[1], [0], [0], [1], [0, 0, 1, 1], [], []>} : vector<8x128xbf16>, vector<128x512xbf16>, vector<8x512xf32> -> vector<8x512xf32>
    %116 = arith.addf %113, %115 : vector<8x512xf32>
    %117 = vector.extract_strided_slice %116 {offsets = [0, 0], sizes = [8, 128], strides = [1, 1]} : vector<8x512xf32> to vector<8x128xf32>
    %118 = arith.negf %117 : vector<8x128xf32>
    %119 = math.exp %118 : vector<8x128xf32>
    %cst_36 = arith.constant 1.000000e+00 : f32
    %120 = vector.broadcast %cst_36 : f32 to vector<8x128xf32>
    %121 = arith.addf %120, %119 : vector<8x128xf32>
    %122 = arith.divf %120, %121 : vector<8x128xf32>
    %123 = vector.extract_strided_slice %116 {offsets = [0, 128], sizes = [8, 128], strides = [1, 1]} : vector<8x512xf32> to vector<8x128xf32>
    %124 = arith.negf %123 : vector<8x128xf32>
    %125 = math.exp %124 : vector<8x128xf32>
    %cst_37 = arith.constant 1.000000e+00 : f32
    %126 = vector.broadcast %cst_37 : f32 to vector<8x128xf32>
    %127 = arith.addf %126, %125 : vector<8x128xf32>
    %128 = arith.divf %126, %127 : vector<8x128xf32>
    %129 = vector.extract_strided_slice %116 {offsets = [0, 256], sizes = [8, 128], strides = [1, 1]} : vector<8x512xf32> to vector<8x128xf32>
    %130 = math.tanh %129 : vector<8x128xf32>
    %131 = vector.extract_strided_slice %116 {offsets = [0, 384], sizes = [8, 128], strides = [1, 1]} : vector<8x512xf32> to vector<8x128xf32>
    %132 = arith.negf %131 : vector<8x128xf32>
    %133 = math.exp %132 : vector<8x128xf32>
    %cst_38 = arith.constant 1.000000e+00 : f32
    %134 = vector.broadcast %cst_38 : f32 to vector<8x128xf32>
    %135 = arith.addf %134, %133 : vector<8x128xf32>
    %136 = arith.divf %134, %135 : vector<8x128xf32>
    %137 = arith.mulf %128, %107 : vector<8x128xf32>
    %138 = arith.mulf %122, %130 : vector<8x128xf32>
    %139 = arith.addf %137, %138 : vector<8x128xf32>
    %140 = math.tanh %139 : vector<8x128xf32>
    %141 = arith.mulf %136, %140 : vector<8x128xf32>
    %c4_i32 = arith.constant 4 : i32
    %c8_i32_39 = arith.constant 8 : i32
    %142 = arith.muli %c4_i32, %c8_i32_39 : i32
    %143 = tpu.assume_multiple %142, 8 : i32
    %144 = arith.index_cast %143 : i32 to index
    %c0_40 = arith.constant 0 : index
    %145 = vector.load %arg8[%144, %c0_40] : memref<64x512xf32, #tpu.memory_space<vmem>>, vector<8x512xf32>
    %146 = arith.truncf %141 : vector<8x128xf32> to vector<8x128xbf16>
    %cst_41 = arith.constant dense<0.000000e+00> : vector<8x512xf32>
    %147 = tpu.matmul %146, %11, %cst_41 {dimension_numbers = #tpu.dot_dimension_numbers<[1], [0], [0], [1], [0, 0, 1, 1], [], []>} : vector<8x128xbf16>, vector<128x512xbf16>, vector<8x512xf32> -> vector<8x512xf32>
    %148 = arith.addf %145, %147 : vector<8x512xf32>
    %149 = vector.extract_strided_slice %148 {offsets = [0, 0], sizes = [8, 128], strides = [1, 1]} : vector<8x512xf32> to vector<8x128xf32>
    %150 = arith.negf %149 : vector<8x128xf32>
    %151 = math.exp %150 : vector<8x128xf32>
    %cst_42 = arith.constant 1.000000e+00 : f32
    %152 = vector.broadcast %cst_42 : f32 to vector<8x128xf32>
    %153 = arith.addf %152, %151 : vector<8x128xf32>
    %154 = arith.divf %152, %153 : vector<8x128xf32>
    %155 = vector.extract_strided_slice %148 {offsets = [0, 128], sizes = [8, 128], strides = [1, 1]} : vector<8x512xf32> to vector<8x128xf32>
    %156 = arith.negf %155 : vector<8x128xf32>
    %157 = math.exp %156 : vector<8x128xf32>
    %cst_43 = arith.constant 1.000000e+00 : f32
    %158 = vector.broadcast %cst_43 : f32 to vector<8x128xf32>
    %159 = arith.addf %158, %157 : vector<8x128xf32>
    %160 = arith.divf %158, %159 : vector<8x128xf32>
    %161 = vector.extract_strided_slice %148 {offsets = [0, 256], sizes = [8, 128], strides = [1, 1]} : vector<8x512xf32> to vector<8x128xf32>
    %162 = math.tanh %161 : vector<8x128xf32>
    %163 = vector.extract_strided_slice %148 {offsets = [0, 384], sizes = [8, 128], strides = [1, 1]} : vector<8x512xf32> to vector<8x128xf32>
    %164 = arith.negf %163 : vector<8x128xf32>
    %165 = math.exp %164 : vector<8x128xf32>
    %cst_44 = arith.constant 1.000000e+00 : f32
    %166 = vector.broadcast %cst_44 : f32 to vector<8x128xf32>
    %167 = arith.addf %166, %165 : vector<8x128xf32>
    %168 = arith.divf %166, %167 : vector<8x128xf32>
    %169 = arith.mulf %160, %139 : vector<8x128xf32>
    %170 = arith.mulf %154, %162 : vector<8x128xf32>
    %171 = arith.addf %169, %170 : vector<8x128xf32>
    %172 = math.tanh %171 : vector<8x128xf32>
    %173 = arith.mulf %168, %172 : vector<8x128xf32>
    %c5_i32 = arith.constant 5 : i32
    %c8_i32_45 = arith.constant 8 : i32
    %174 = arith.muli %c5_i32, %c8_i32_45 : i32
    %175 = tpu.assume_multiple %174, 8 : i32
    %176 = arith.index_cast %175 : i32 to index
    %c0_46 = arith.constant 0 : index
    %177 = vector.load %arg8[%176, %c0_46] : memref<64x512xf32, #tpu.memory_space<vmem>>, vector<8x512xf32>
    %178 = arith.truncf %173 : vector<8x128xf32> to vector<8x128xbf16>
    %cst_47 = arith.constant dense<0.000000e+00> : vector<8x512xf32>
    %179 = tpu.matmul %178, %11, %cst_47 {dimension_numbers = #tpu.dot_dimension_numbers<[1], [0], [0], [1], [0, 0, 1, 1], [], []>} : vector<8x128xbf16>, vector<128x512xbf16>, vector<8x512xf32> -> vector<8x512xf32>
    %180 = arith.addf %177, %179 : vector<8x512xf32>
    %181 = vector.extract_strided_slice %180 {offsets = [0, 0], sizes = [8, 128], strides = [1, 1]} : vector<8x512xf32> to vector<8x128xf32>
    %182 = arith.negf %181 : vector<8x128xf32>
    %183 = math.exp %182 : vector<8x128xf32>
    %cst_48 = arith.constant 1.000000e+00 : f32
    %184 = vector.broadcast %cst_48 : f32 to vector<8x128xf32>
    %185 = arith.addf %184, %183 : vector<8x128xf32>
    %186 = arith.divf %184, %185 : vector<8x128xf32>
    %187 = vector.extract_strided_slice %180 {offsets = [0, 128], sizes = [8, 128], strides = [1, 1]} : vector<8x512xf32> to vector<8x128xf32>
    %188 = arith.negf %187 : vector<8x128xf32>
    %189 = math.exp %188 : vector<8x128xf32>
    %cst_49 = arith.constant 1.000000e+00 : f32
    %190 = vector.broadcast %cst_49 : f32 to vector<8x128xf32>
    %191 = arith.addf %190, %189 : vector<8x128xf32>
    %192 = arith.divf %190, %191 : vector<8x128xf32>
    %193 = vector.extract_strided_slice %180 {offsets = [0, 256], sizes = [8, 128], strides = [1, 1]} : vector<8x512xf32> to vector<8x128xf32>
    %194 = math.tanh %193 : vector<8x128xf32>
    %195 = vector.extract_strided_slice %180 {offsets = [0, 384], sizes = [8, 128], strides = [1, 1]} : vector<8x512xf32> to vector<8x128xf32>
    %196 = arith.negf %195 : vector<8x128xf32>
    %197 = math.exp %196 : vector<8x128xf32>
    %cst_50 = arith.constant 1.000000e+00 : f32
    %198 = vector.broadcast %cst_50 : f32 to vector<8x128xf32>
    %199 = arith.addf %198, %197 : vector<8x128xf32>
    %200 = arith.divf %198, %199 : vector<8x128xf32>
    %201 = arith.mulf %192, %171 : vector<8x128xf32>
    %202 = arith.mulf %186, %194 : vector<8x128xf32>
    %203 = arith.addf %201, %202 : vector<8x128xf32>
    %204 = math.tanh %203 : vector<8x128xf32>
    %205 = arith.mulf %200, %204 : vector<8x128xf32>
    %c6_i32 = arith.constant 6 : i32
    %c8_i32_51 = arith.constant 8 : i32
    %206 = arith.muli %c6_i32, %c8_i32_51 : i32
    %207 = tpu.assume_multiple %206, 8 : i32
    %208 = arith.index_cast %207 : i32 to index
    %c0_52 = arith.constant 0 : index
    %209 = vector.load %arg8[%208, %c0_52] : memref<64x512xf32, #tpu.memory_space<vmem>>, vector<8x512xf32>
    %210 = arith.truncf %205 : vector<8x128xf32> to vector<8x128xbf16>
    %cst_53 = arith.constant dense<0.000000e+00> : vector<8x512xf32>
    %211 = tpu.matmul %210, %11, %cst_53 {dimension_numbers = #tpu.dot_dimension_numbers<[1], [0], [0], [1], [0, 0, 1, 1], [], []>} : vector<8x128xbf16>, vector<128x512xbf16>, vector<8x512xf32> -> vector<8x512xf32>
    %212 = arith.addf %209, %211 : vector<8x512xf32>
    %213 = vector.extract_strided_slice %212 {offsets = [0, 0], sizes = [8, 128], strides = [1, 1]} : vector<8x512xf32> to vector<8x128xf32>
    %214 = arith.negf %213 : vector<8x128xf32>
    %215 = math.exp %214 : vector<8x128xf32>
    %cst_54 = arith.constant 1.000000e+00 : f32
    %216 = vector.broadcast %cst_54 : f32 to vector<8x128xf32>
    %217 = arith.addf %216, %215 : vector<8x128xf32>
    %218 = arith.divf %216, %217 : vector<8x128xf32>
    %219 = vector.extract_strided_slice %212 {offsets = [0, 128], sizes = [8, 128], strides = [1, 1]} : vector<8x512xf32> to vector<8x128xf32>
    %220 = arith.negf %219 : vector<8x128xf32>
    %221 = math.exp %220 : vector<8x128xf32>
    %cst_55 = arith.constant 1.000000e+00 : f32
    %222 = vector.broadcast %cst_55 : f32 to vector<8x128xf32>
    %223 = arith.addf %222, %221 : vector<8x128xf32>
    %224 = arith.divf %222, %223 : vector<8x128xf32>
    %225 = vector.extract_strided_slice %212 {offsets = [0, 256], sizes = [8, 128], strides = [1, 1]} : vector<8x512xf32> to vector<8x128xf32>
    %226 = math.tanh %225 : vector<8x128xf32>
    %227 = vector.extract_strided_slice %212 {offsets = [0, 384], sizes = [8, 128], strides = [1, 1]} : vector<8x512xf32> to vector<8x128xf32>
    %228 = arith.negf %227 : vector<8x128xf32>
    %229 = math.exp %228 : vector<8x128xf32>
    %cst_56 = arith.constant 1.000000e+00 : f32
    %230 = vector.broadcast %cst_56 : f32 to vector<8x128xf32>
    %231 = arith.addf %230, %229 : vector<8x128xf32>
    %232 = arith.divf %230, %231 : vector<8x128xf32>
    %233 = arith.mulf %224, %203 : vector<8x128xf32>
    %234 = arith.mulf %218, %226 : vector<8x128xf32>
    %235 = arith.addf %233, %234 : vector<8x128xf32>
    %236 = math.tanh %235 : vector<8x128xf32>
    %237 = arith.mulf %232, %236 : vector<8x128xf32>
    %c7_i32 = arith.constant 7 : i32
    %c8_i32_57 = arith.constant 8 : i32
    %238 = arith.muli %c7_i32, %c8_i32_57 : i32
    %239 = tpu.assume_multiple %238, 8 : i32
    %240 = arith.index_cast %239 : i32 to index
    %c0_58 = arith.constant 0 : index
    %241 = vector.load %arg8[%240, %c0_58] : memref<64x512xf32, #tpu.memory_space<vmem>>, vector<8x512xf32>
    %242 = arith.truncf %237 : vector<8x128xf32> to vector<8x128xbf16>
    %cst_59 = arith.constant dense<0.000000e+00> : vector<8x512xf32>
    %243 = tpu.matmul %242, %11, %cst_59 {dimension_numbers = #tpu.dot_dimension_numbers<[1], [0], [0], [1], [0, 0, 1, 1], [], []>} : vector<8x128xbf16>, vector<128x512xbf16>, vector<8x512xf32> -> vector<8x512xf32>
    %244 = arith.addf %241, %243 : vector<8x512xf32>
    %245 = vector.extract_strided_slice %244 {offsets = [0, 0], sizes = [8, 128], strides = [1, 1]} : vector<8x512xf32> to vector<8x128xf32>
    %246 = arith.negf %245 : vector<8x128xf32>
    %247 = math.exp %246 : vector<8x128xf32>
    %cst_60 = arith.constant 1.000000e+00 : f32
    %248 = vector.broadcast %cst_60 : f32 to vector<8x128xf32>
    %249 = arith.addf %248, %247 : vector<8x128xf32>
    %250 = arith.divf %248, %249 : vector<8x128xf32>
    %251 = vector.extract_strided_slice %244 {offsets = [0, 128], sizes = [8, 128], strides = [1, 1]} : vector<8x512xf32> to vector<8x128xf32>
    %252 = arith.negf %251 : vector<8x128xf32>
    %253 = math.exp %252 : vector<8x128xf32>
    %cst_61 = arith.constant 1.000000e+00 : f32
    %254 = vector.broadcast %cst_61 : f32 to vector<8x128xf32>
    %255 = arith.addf %254, %253 : vector<8x128xf32>
    %256 = arith.divf %254, %255 : vector<8x128xf32>
    %257 = vector.extract_strided_slice %244 {offsets = [0, 256], sizes = [8, 128], strides = [1, 1]} : vector<8x512xf32> to vector<8x128xf32>
    %258 = math.tanh %257 : vector<8x128xf32>
    %259 = vector.extract_strided_slice %244 {offsets = [0, 384], sizes = [8, 128], strides = [1, 1]} : vector<8x512xf32> to vector<8x128xf32>
    %260 = arith.negf %259 : vector<8x128xf32>
    %261 = math.exp %260 : vector<8x128xf32>
    %cst_62 = arith.constant 1.000000e+00 : f32
    %262 = vector.broadcast %cst_62 : f32 to vector<8x128xf32>
    %263 = arith.addf %262, %261 : vector<8x128xf32>
    %264 = arith.divf %262, %263 : vector<8x128xf32>
    %265 = arith.mulf %256, %235 : vector<8x128xf32>
    %266 = arith.mulf %250, %258 : vector<8x128xf32>
    %267 = arith.addf %265, %266 : vector<8x128xf32>
    %268 = math.tanh %267 : vector<8x128xf32>
    %269 = arith.mulf %264, %268 : vector<8x128xf32>
    %c8_i32_63 = arith.constant 8 : i32
    %c0_64 = arith.constant 0 : index
    %c0_65 = arith.constant 0 : index
    %270 = vector.load %arg6[%c0_64, %c0_65] : memref<8x128xf32, #tpu.memory_space<vmem>>, vector<8x128xf32>
    tpu.vector_store %arg6[%c0_64, %c0_65], %269 {strides = array<i32>} : memref<8x128xf32, #tpu.memory_space<vmem>>, vector<8x128xf32>,
    %c0_66 = arith.constant 0 : index
    %c0_67 = arith.constant 0 : index
    %271 = vector.load %arg7[%c0_66, %c0_67] : memref<8x128xf32, #tpu.memory_space<vmem>>, vector<8x128xf32>
    tpu.vector_store %arg7[%c0_66, %c0_67], %267 {strides = array<i32>} : memref<8x128xf32, #tpu.memory_space<vmem>>, vector<8x128xf32>,
    return
  }
  func.func @transform_0(%arg0: i32, %arg1: i32) -> (i32, i32, i32) {
    %c0_i32 = arith.constant 0 : i32
    %c0_i32_0 = arith.constant 0 : i32
    return %arg1, %arg0, %c0_i32 : i32, i32, i32
  }
  func.func @transform_1(%arg0: i32, %arg1: i32) -> (i32, i32) {
    %c0_i32 = arith.constant 0 : i32
    %c0_i32_0 = arith.constant 0 : i32
    %c0_i32_1 = arith.constant 0 : i32
    return %c0_i32, %c0_i32_0 : i32, i32
  }
  func.func @transform_2(%arg0: i32, %arg1: i32) -> (i32, i32) {
    %c0_i32 = arith.constant 0 : i32
    %c0_i32_0 = arith.constant 0 : i32
    %c0_i32_1 = arith.constant 0 : i32
    return %c0_i32, %c0_i32_0 : i32, i32
  }
  func.func @transform_3(%arg0: i32, %arg1: i32) -> (i32, i32) {
    %c0_i32 = arith.constant 0 : i32
    %c0_i32_0 = arith.constant 0 : i32
    %c0_i32_1 = arith.constant 0 : i32
    return %c0_i32, %c0_i32_0 : i32, i32
  }
  func.func @transform_4(%arg0: i32, %arg1: i32) -> (i32, i32) {
    %c0_i32 = arith.constant 0 : i32
    %c0_i32_0 = arith.constant 0 : i32
    return %arg0, %c0_i32 : i32, i32
  }
  func.func @transform_5(%arg0: i32, %arg1: i32) -> (i32, i32) {
    %c0_i32 = arith.constant 0 : i32
    %c0_i32_0 = arith.constant 0 : i32
    return %arg0, %c0_i32 : i32, i32
  }
}

</mosaic_0001>

<llo_original>
// kernel: model_forward.1
$region0: #{model_forward.1}
  #allocation0 [shape = 'u32[]', space=smem, size = 0x4, offset = 0x4, fixed_abs, tag = 'smem constant byte address 0x4 - core index']
  #allocation1 [shape = 'u32[72,128]{1,0:T(1,128)}', space=vmem, size = 0x9000, scoped, tag = 'internal scratch']
  #allocation2 [shape = 'f32[64,512]{1,0:T(8,128)}', space=vmem, size = 0x20000, scoped, tag = 'scratch operand']
  %s0 = inlined_call_operand.vmem [shape: bf16[8,8,128], index: 0, kind: input, shape index: {}]
  %s1 = inlined_call_operand.vmem [shape: bf16[128,512], index: 1, kind: input, shape index: {}]
  %s2 = inlined_call_operand.vmem [shape: bf16[128,512], index: 2, kind: input, shape index: {}]
  %s3 = inlined_call_operand.vmem [shape: f32[1,512], index: 3, kind: input, shape index: {}]
  %s4 = inlined_call_operand.vmem [shape: f32[8,128], index: 4, kind: output, shape index: {0}]
  %s5 = inlined_call_operand.hbm [shape: f32[8,128], index: 5, kind: output, shape index: {1}]
  %6 = xla_tuple %s4, %s5
  %s7 = sld [smem:[#allocation0]]
  $region38: #{model_forward.1} parent=0
    _
  %s9 = ssub.s32 1, %s7
  %s10 = scalar_select 0, %s9, %s7
  $region1: #{model_forward.1} parent=0
    #allocation3 [shape = 'u8[4096]{0}', space=vmem, size = 0x1000, scoped, tag = 'output window, operand 1, single buffered']
    #allocation4 [shape = 's32[1]{0}', space=sflag, size = 0x4, scoped, tag = 'scoped memory for model_forward.1']
    %11 = vsyncpa [#allocation4], 0
    // Predicated region
    $region2: #{model_forward.1} parent=1 // pred_check
      _
    $region3: #{model_forward.1} parent=1 // pred_check_branch
      %13 = sbr.rel (0) target = $region5
    $region4: #{model_forward.1} parent=1 // pred_region
      _
    $region5: #{model_forward.1} parent=1 // pred_fallthru
      _
    // Predicated region
    $region6: #{model_forward.1} parent=1 // pred_check
      _
    $region7: #{model_forward.1} parent=1 // pred_check_branch
      %15 = sbr.rel (0) target = $region9
    $region8: #{model_forward.1} parent=1 // pred_region
      _
    $region9: #{model_forward.1} parent=1 // pred_fallthru
      _
    // Predicated region
    $region10: #{model_forward.1} parent=1 // pred_check
      _
    $region11: #{model_forward.1} parent=1 // pred_check_branch
      %17 = sbr.rel (0) target = $region13
    $region12: #{model_forward.1} parent=1 // pred_region
      _
    $region13: #{model_forward.1} parent=1 // pred_fallthru
      _
    // Predicated region
    $region14: #{model_forward.1} parent=1 // pred_check
      _
    $region15: #{model_forward.1} parent=1 // pred_check_branch
      %19 = sbr.rel (0) target = $region17
    $region16: #{model_forward.1} parent=1 // pred_region
      _
    $region17: #{model_forward.1} parent=1 // pred_fallthru
      _
    %p20 = scmp.eq.s32.totalorder 0, 0
    // Predicated region
    $region18: #{model_forward.1} parent=1 // pred_check
      %p21 = pneg %p20
    $region19: #{model_forward.1} parent=1 // pred_check_branch
      %23 = sbr.rel (%p21) target = $region21
    $region20: #{model_forward.1} parent=1 // pred_region
      %24 = vst [vmem:[%s4] sm:$0xff] 0.0
      %25 = vst [vmem:[#allocation3] sm:$0xff] 0.0
    $region21: #{model_forward.1} parent=1 // pred_fallthru
      _
    %v26 = vld [vmem:[%s0] sm:$0xf]
    %v27 = vld [vmem:[%s0 + $0x4] sm:$0xf]
    %v28 = vld [vmem:[%s0 + $0x8] sm:$0xf]
    %v29 = vld [vmem:[%s0 + $0xc] sm:$0xf]
    %v30 = vld [vmem:[%s0 + $0x10] sm:$0xf]
    %v31 = vld [vmem:[%s0 + $0x14] sm:$0xf]
    %v32 = vld [vmem:[%s0 + $0x18] sm:$0xf]
    %v33 = vld [vmem:[%s0 + $0x1c] sm:$0xf]
    %v34 = vld [vmem:[%s1] sm:$0xff]
    %v35 = vld [vmem:[%s1 + $0x8] sm:$0xff]
    %v36 = vld [vmem:[%s1 + $0x10] sm:$0xff]
    %v37 = vld [vmem:[%s1 + $0x18] sm:$0xff]
    %v38 = vld [vmem:[%s1 + $0x20] sm:$0xff]
    %v39 = vld [vmem:[%s1 + $0x28] sm:$0xff]
    %v40 = vld [vmem:[%s1 + $0x30] sm:$0xff]
    %v41 = vld [vmem:[%s1 + $0x38] sm:$0xff]
    %v42 = vld [vmem:[%s1 + $0x40] sm:$0xff]
    %v43 = vld [vmem:[%s1 + $0x48] sm:$0xff]
    %v44 = vld [vmem:[%s1 + $0x50] sm:$0xff]
    %v45 = vld [vmem:[%s1 + $0x58] sm:$0xff]
    %v46 = vld [vmem:[%s1 + $0x60] sm:$0xff]
    %v47 = vld [vmem:[%s1 + $0x68] sm:$0xff]
    %v48 = vld [vmem:[%s1 + $0x70] sm:$0xff]
    %v49 = vld [vmem:[%s1 + $0x78] sm:$0xff]
    %v50 = vld [vmem:[%s1 + $0x80] sm:$0xff]
    %v51 = vld [vmem:[%s1 + $0x88] sm:$0xff]
    %v52 = vld [vmem:[%s1 + $0x90] sm:$0xff]
    %v53 = vld [vmem:[%s1 + $0x98] sm:$0xff]
    %v54 = vld [vmem:[%s1 + $0xa0] sm:$0xff]
    %v55 = vld [vmem:[%s1 + $0xa8] sm:$0xff]
    %v56 = vld [vmem:[%s1 + $0xb0] sm:$0xff]
    %v57 = vld [vmem:[%s1 + $0xb8] sm:$0xff]
    %v58 = vld [vmem:[%s1 + $0xc0] sm:$0xff]
    %v59 = vld [vmem:[%s1 + $0xc8] sm:$0xff]
    %v60 = vld [vmem:[%s1 + $0xd0] sm:$0xff]
    %v61 = vld [vmem:[%s1 + $0xd8] sm:$0xff]
    %v62 = vld [vmem:[%s1 + $0xe0] sm:$0xff]
    %v63 = vld [vmem:[%s1 + $0xe8] sm:$0xff]
    %v64 = vld [vmem:[%s1 + $0xf0] sm:$0xff]
    %v65 = vld [vmem:[%s1 + $0xf8] sm:$0xff]
    %v66 = vld [vmem:[%s3] sm:$0xf]
    %v68 = vperm.slane %v66, 0
    %v69 = vperm.slane %v66, 1
    %v70 = vperm.slane %v66, 2
    %v71 = vperm.slane %v66, 3
    %v84 = vunpack.c.l.b16 %v26
    %v85 = vunpack.c.l.b16 %v27
    %v86 = vunpack.c.l.b16 %v28
    %v87 = vunpack.c.l.b16 %v29
    %v88 = vunpack.c.l.b16 %v30
    %v89 = vunpack.c.l.b16 %v31
    %v90 = vunpack.c.l.b16 %v32
    %v91 = vunpack.c.l.b16 %v33
    %v92 = vpack.c.b16 %v85, %v84
    %v93 = vpack.c.b16 %v87, %v86
    %v94 = vpack.c.b16 %v89, %v88
    %v95 = vpack.c.b16 %v91, %v90
    %v132 = vunpack.c.l.b16 %v34
    %v133 = vunpack.c.h.b16 %v34
    %v134 = vunpack.c.l.b16 %v35
    %v135 = vunpack.c.h.b16 %v35
    %v136 = vunpack.c.l.b16 %v36
    %v137 = vunpack.c.h.b16 %v36
    %v138 = vunpack.c.l.b16 %v37
    %v139 = vunpack.c.h.b16 %v37
    %v140 = vunpack.c.l.b16 %v38
    %v141 = vunpack.c.h.b16 %v38
    %v142 = vunpack.c.l.b16 %v39
    %v143 = vunpack.c.h.b16 %v39
    %v144 = vunpack.c.l.b16 %v40
    %v145 = vunpack.c.h.b16 %v40
    %v146 = vunpack.c.l.b16 %v41
    %v147 = vunpack.c.h.b16 %v41
    %v148 = vunpack.c.l.b16 %v42
    %v149 = vunpack.c.h.b16 %v42
    %v150 = vunpack.c.l.b16 %v43
    %v151 = vunpack.c.h.b16 %v43
    %v152 = vunpack.c.l.b16 %v44
    %v153 = vunpack.c.h.b16 %v44
    %v154 = vunpack.c.l.b16 %v45
    %v155 = vunpack.c.h.b16 %v45
    %v156 = vunpack.c.l.b16 %v46
    %v157 = vunpack.c.h.b16 %v46
    %v158 = vunpack.c.l.b16 %v47
    %v159 = vunpack.c.h.b16 %v47
    %v160 = vunpack.c.l.b16 %v48
    %v161 = vunpack.c.h.b16 %v48
    %v162 = vunpack.c.l.b16 %v49
    %v163 = vunpack.c.h.b16 %v49
    %v164 = vunpack.c.l.b16 %v50
    %v165 = vunpack.c.h.b16 %v50
    %v166 = vunpack.c.l.b16 %v51
    %v167 = vunpack.c.h.b16 %v51
    %v168 = vunpack.c.l.b16 %v52
    %v169 = vunpack.c.h.b16 %v52
    %v170 = vunpack.c.l.b16 %v53
    %v171 = vunpack.c.h.b16 %v53
    %v172 = vunpack.c.l.b16 %v54
    %v173 = vunpack.c.h.b16 %v54
    %v174 = vunpack.c.l.b16 %v55
    %v175 = vunpack.c.h.b16 %v55
    %v176 = vunpack.c.l.b16 %v56
    %v177 = vunpack.c.h.b16 %v56
    %v178 = vunpack.c.l.b16 %v57
    %v179 = vunpack.c.h.b16 %v57
    %v180 = vunpack.c.l.b16 %v58
    %v181 = vunpack.c.h.b16 %v58
    %v182 = vunpack.c.l.b16 %v59
    %v183 = vunpack.c.h.b16 %v59
    %v184 = vunpack.c.l.b16 %v60
    %v185 = vunpack.c.h.b16 %v60
    %v186 = vunpack.c.l.b16 %v61
    %v187 = vunpack.c.h.b16 %v61
    %v188 = vunpack.c.l.b16 %v62
    %v189 = vunpack.c.h.b16 %v62
    %v190 = vunpack.c.l.b16 %v63
    %v191 = vunpack.c.h.b16 %v63
    %v192 = vunpack.c.l.b16 %v64
    %v193 = vunpack.c.h.b16 %v64
    %v194 = vunpack.c.l.b16 %v65
    %v195 = vunpack.c.h.b16 %v65
    %v196 = vpack.c.b16 %v136, %v132
    %v197 = vpack.c.b16 %v137, %v133
    %v198 = vpack.c.b16 %v138, %v134
    %v199 = vpack.c.b16 %v139, %v135
    %v200 = vpack.c.b16 %v144, %v140
    %v201 = vpack.c.b16 %v145, %v141
    %v202 = vpack.c.b16 %v146, %v142
    %v203 = vpack.c.b16 %v147, %v143
    %v204 = vpack.c.b16 %v152, %v148
    %v205 = vpack.c.b16 %v153, %v149
    %v206 = vpack.c.b16 %v154, %v150
    %v207 = vpack.c.b16 %v155, %v151
    %v208 = vpack.c.b16 %v160, %v156
    %v209 = vpack.c.b16 %v161, %v157
    %v210 = vpack.c.b16 %v162, %v158
    %v211 = vpack.c.b16 %v163, %v159
    %v212 = vpack.c.b16 %v168, %v164
    %v213 = vpack.c.b16 %v169, %v165
    %v214 = vpack.c.b16 %v170, %v166
    %v215 = vpack.c.b16 %v171, %v167
    %v216 = vpack.c.b16 %v176, %v172
    %v217 = vpack.c.b16 %v177, %v173
    %v218 = vpack.c.b16 %v178, %v174
    %v219 = vpack.c.b16 %v179, %v175
    %v220 = vpack.c.b16 %v184, %v180
    %v221 = vpack.c.b16 %v185, %v181
    %v222 = vpack.c.b16 %v186, %v182
    %v223 = vpack.c.b16 %v187, %v183
    %v224 = vpack.c.b16 %v192, %v188
    %v225 = vpack.c.b16 %v193, %v189
    %v226 = vpack.c.b16 %v194, %v190
    %v227 = vpack.c.b16 %v195, %v191
    %260 = vmatpush.bf16.msra.mxu0 %v224
    %261 = vmatpush.bf16.msra.mxu0 %v220
    %262 = vmatpush.bf16.msra.mxu0 %v216
    %263 = vmatpush.bf16.msra.mxu0 %v212
    %264 = vmatpush.bf16.msra.mxu0 %v208
    %265 = vmatpush.bf16.msra.mxu0 %v204
    %266 = vmatpush.bf16.msra.mxu0 %v200
    %267 = vmatpush.bf16.msra.mxu0 %v196
    %268 = vmatmul.bf16.gmra.mxu0 %v92
    %v269 = vpop.f32.mrf.mxu0
    %v270 = vadd.f32 %v68, %v269
    %v271 = vpop.f32.mrf.mxu0
    %v272 = vadd.f32 %v68, %v271
    %273 = vmatmul.bf16.gmra.mxu0 %v93
    %v274 = vpop.f32.mrf.mxu0
    %v275 = vadd.f32 %v68, %v274
    %v276 = vpop.f32.mrf.mxu0
    %v277 = vadd.f32 %v68, %v276
    %278 = vmatmul.bf16.gmra.mxu0 %v94
    %v279 = vpop.f32.mrf.mxu0
    %v280 = vadd.f32 %v68, %v279
    %v281 = vpop.f32.mrf.mxu0
    %v282 = vadd.f32 %v68, %v281
    %283 = vmatmul.bf16.gmra.mxu0 %v95
    %v284 = vpop.f32.mrf.mxu0
    %v285 = vadd.f32 %v68, %v284
    %v286 = vpop.f32.mrf.mxu0
    %v287 = vadd.f32 %v68, %v286
    %288 = vdwg.mxu0
    %289 = vmatpush.bf16.msra.mxu0 %v225
    %290 = vmatpush.bf16.msra.mxu0 %v221
    %291 = vmatpush.bf16.msra.mxu0 %v217
    %292 = vmatpush.bf16.msra.mxu0 %v213
    %293 = vmatpush.bf16.msra.mxu0 %v209
    %294 = vmatpush.bf16.msra.mxu0 %v205
    %295 = vmatpush.bf16.msra.mxu0 %v201
    %296 = vmatpush.bf16.msra.mxu0 %v197
    %297 = vmatmul.bf16.gmra.mxu0 %v92
    %v298 = vpop.f32.mrf.mxu0
    %v299 = vadd.f32 %v69, %v298
    %v300 = vpop.f32.mrf.mxu0
    %v301 = vadd.f32 %v69, %v300
    %302 = vmatmul.bf16.gmra.mxu0 %v93
    %v303 = vpop.f32.mrf.mxu0
    %v304 = vadd.f32 %v69, %v303
    %v305 = vpop.f32.mrf.mxu0
    %v306 = vadd.f32 %v69, %v305
    %307 = vmatmul.bf16.gmra.mxu0 %v94
    %v308 = vpop.f32.mrf.mxu0
    %v309 = vadd.f32 %v69, %v308
    %v310 = vpop.f32.mrf.mxu0
    %v311 = vadd.f32 %v69, %v310
    %312 = vmatmul.bf16.gmra.mxu0 %v95
    %v313 = vpop.f32.mrf.mxu0
    %v314 = vadd.f32 %v69, %v313
    %v315 = vpop.f32.mrf.mxu0
    %v316 = vadd.f32 %v69, %v315
    %317 = vdwg.mxu0
    %318 = vmatpush.bf16.msra.mxu0 %v226
    %319 = vmatpush.bf16.msra.mxu0 %v222
    %320 = vmatpush.bf16.msra.mxu0 %v218
    %321 = vmatpush.bf16.msra.mxu0 %v214
    %322 = vmatpush.bf16.msra.mxu0 %v210
    %323 = vmatpush.bf16.msra.mxu0 %v206
    %324 = vmatpush.bf16.msra.mxu0 %v202
    %325 = vmatpush.bf16.msra.mxu0 %v198
    %326 = vmatmul.bf16.gmra.mxu0 %v92
    %v327 = vpop.f32.mrf.mxu0
    %v328 = vadd.f32 %v70, %v327
    %v329 = vpop.f32.mrf.mxu0
    %v330 = vadd.f32 %v70, %v329
    %331 = vmatmul.bf16.gmra.mxu0 %v93
    %v332 = vpop.f32.mrf.mxu0
    %v333 = vadd.f32 %v70, %v332
    %v334 = vpop.f32.mrf.mxu0
    %v335 = vadd.f32 %v70, %v334
    %336 = vmatmul.bf16.gmra.mxu0 %v94
    %v337 = vpop.f32.mrf.mxu0
    %v338 = vadd.f32 %v70, %v337
    %v339 = vpop.f32.mrf.mxu0
    %v340 = vadd.f32 %v70, %v339
    %341 = vmatmul.bf16.gmra.mxu0 %v95
    %v342 = vpop.f32.mrf.mxu0
    %v343 = vadd.f32 %v70, %v342
    %v344 = vpop.f32.mrf.mxu0
    %v345 = vadd.f32 %v70, %v344
    %346 = vdwg.mxu0
    %347 = vmatpush.bf16.msra.mxu0 %v227
    %348 = vmatpush.bf16.msra.mxu0 %v223
    %349 = vmatpush.bf16.msra.mxu0 %v219
    %350 = vmatpush.bf16.msra.mxu0 %v215
    %351 = vmatpush.bf16.msra.mxu0 %v211
    %352 = vmatpush.bf16.msra.mxu0 %v207
    %353 = vmatpush.bf16.msra.mxu0 %v203
    %354 = vmatpush.bf16.msra.mxu0 %v199
    %355 = vmatmul.bf16.gmra.mxu0 %v92
    %v356 = vpop.f32.mrf.mxu0
    %v357 = vadd.f32 %v71, %v356
    %v358 = vpop.f32.mrf.mxu0
    %v359 = vadd.f32 %v71, %v358
    %360 = vmatmul.bf16.gmra.mxu0 %v93
    %v361 = vpop.f32.mrf.mxu0
    %v362 = vadd.f32 %v71, %v361
    %v363 = vpop.f32.mrf.mxu0
    %v364 = vadd.f32 %v71, %v363
    %365 = vmatmul.bf16.gmra.mxu0 %v94
    %v366 = vpop.f32.mrf.mxu0
    %v367 = vadd.f32 %v71, %v366
    %v368 = vpop.f32.mrf.mxu0
    %v369 = vadd.f32 %v71, %v368
    %370 = vmatmul.bf16.gmra.mxu0 %v95
    %v371 = vpop.f32.mrf.mxu0
    %v372 = vadd.f32 %v71, %v371
    %v373 = vpop.f32.mrf.mxu0
    %v374 = vadd.f32 %v71, %v373
    %375 = vdwg.mxu0
    %376 = vst [vmem:[#allocation2] sm:$0xff] %v270
    %377 = vst [vmem:[#allocation2 + $0x8] sm:$0xff] %v299
    %378 = vst [vmem:[#allocation2 + $0x10] sm:$0xff] %v328
    %379 = vst [vmem:[#allocation2 + $0x18] sm:$0xff] %v357
    %380 = vst [vmem:[#allocation2 + $0x20] sm:$0xff] %v272
    %381 = vst [vmem:[#allocation2 + $0x28] sm:$0xff] %v301
    %382 = vst [vmem:[#allocation2 + $0x30] sm:$0xff] %v330
    %383 = vst [vmem:[#allocation2 + $0x38] sm:$0xff] %v359
    %384 = vst [vmem:[#allocation2 + $0x40] sm:$0xff] %v275
    %385 = vst [vmem:[#allocation2 + $0x48] sm:$0xff] %v304
    %386 = vst [vmem:[#allocation2 + $0x50] sm:$0xff] %v333
    %387 = vst [vmem:[#allocation2 + $0x58] sm:$0xff] %v362
    %388 = vst [vmem:[#allocation2 + $0x60] sm:$0xff] %v277
    %389 = vst [vmem:[#allocation2 + $0x68] sm:$0xff] %v306
    %390 = vst [vmem:[#allocation2 + $0x70] sm:$0xff] %v335
    %391 = vst [vmem:[#allocation2 + $0x78] sm:$0xff] %v364
    %392 = vst [vmem:[#allocation2 + $0x80] sm:$0xff] %v280
    %393 = vst [vmem:[#allocation2 + $0x88] sm:$0xff] %v309
    %394 = vst [vmem:[#allocation2 + $0x90] sm:$0xff] %v338
    %395 = vst [vmem:[#allocation2 + $0x98] sm:$0xff] %v367
    %396 = vst [vmem:[#allocation2 + $0xa0] sm:$0xff] %v282
    %397 = vst [vmem:[#allocation2 + $0xa8] sm:$0xff] %v311
    %398 = vst [vmem:[#allocation2 + $0xb0] sm:$0xff] %v340
    %399 = vst [vmem:[#allocation2 + $0xb8] sm:$0xff] %v369
    %400 = vst [vmem:[#allocation2 + $0xc0] sm:$0xff] %v285
    %401 = vst [vmem:[#allocation2 + $0xc8] sm:$0xff] %v314
    %402 = vst [vmem:[#allocation2 + $0xd0] sm:$0xff] %v343
    %403 = vst [vmem:[#allocation2 + $0xd8] sm:$0xff] %v372
    %404 = vst [vmem:[#allocation2 + $0xe0] sm:$0xff] %v287
    %405 = vst [vmem:[#allocation2 + $0xe8] sm:$0xff] %v316
    %406 = vst [vmem:[#allocation2 + $0xf0] sm:$0xff] %v345
    %407 = vst [vmem:[#allocation2 + $0xf8] sm:$0xff] %v374
    %v408 = vld [vmem:[%s2] sm:$0xff]
    %v409 = vld [vmem:[%s2 + $0x8] sm:$0xff]
    %v410 = vld [vmem:[%s2 + $0x10] sm:$0xff]
    %v411 = vld [vmem:[%s2 + $0x18] sm:$0xff]
    %v412 = vld [vmem:[%s2 + $0x20] sm:$0xff]
    %v413 = vld [vmem:[%s2 + $0x28] sm:$0xff]
    %v414 = vld [vmem:[%s2 + $0x30] sm:$0xff]
    %v415 = vld [vmem:[%s2 + $0x38] sm:$0xff]
    %v416 = vld [vmem:[%s2 + $0x40] sm:$0xff]
    %v417 = vld [vmem:[%s2 + $0x48] sm:$0xff]
    %v418 = vld [vmem:[%s2 + $0x50] sm:$0xff]
    %v419 = vld [vmem:[%s2 + $0x58] sm:$0xff]
    %v420 = vld [vmem:[%s2 + $0x60] sm:$0xff]
    %v421 = vld [vmem:[%s2 + $0x68] sm:$0xff]
    %v422 = vld [vmem:[%s2 + $0x70] sm:$0xff]
    %v423 = vld [vmem:[%s2 + $0x78] sm:$0xff]
    %v424 = vld [vmem:[%s2 + $0x80] sm:$0xff]
    %v425 = vld [vmem:[%s2 + $0x88] sm:$0xff]
    %v426 = vld [vmem:[%s2 + $0x90] sm:$0xff]
    %v427 = vld [vmem:[%s2 + $0x98] sm:$0xff]
    %v428 = vld [vmem:[%s2 + $0xa0] sm:$0xff]
    %v429 = vld [vmem:[%s2 + $0xa8] sm:$0xff]
    %v430 = vld [vmem:[%s2 + $0xb0] sm:$0xff]
    %v431 = vld [vmem:[%s2 + $0xb8] sm:$0xff]
    %v432 = vld [vmem:[%s2 + $0xc0] sm:$0xff]
    %v433 = vld [vmem:[%s2 + $0xc8] sm:$0xff]
    %v434 = vld [vmem:[%s2 + $0xd0] sm:$0xff]
    %v435 = vld [vmem:[%s2 + $0xd8] sm:$0xff]
    %v436 = vld [vmem:[%s2 + $0xe0] sm:$0xff]
    %v437 = vld [vmem:[%s2 + $0xe8] sm:$0xff]
    %v438 = vld [vmem:[%s2 + $0xf0] sm:$0xff]
    %v439 = vld [vmem:[%s2 + $0xf8] sm:$0xff]
    %v440 = vld [vmem:[%s4] sm:$0xff]
    %v441 = vld [vmem:[#allocation3] sm:$0xff]
    %s442 = smul.u32 0, 4
    %s443 = smul.addr %s442, 8
    %s444 = scalar_lea.vmem [#allocation2], %s443
    %v445 = vld [vmem:[%s444] sm:$0xff]
    %v446 = vld [vmem:[%s444 + $0x8] sm:$0xff]
    %v447 = vld [vmem:[%s444 + $0x10] sm:$0xff]
    %v448 = vld [vmem:[%s444 + $0x18] sm:$0xff]
    %v449 = vpack.c.bf16 %v440, %v440
    %v482 = vunpack.c.l.b16 %v408
    %v483 = vunpack.c.h.b16 %v408
    %v484 = vunpack.c.l.b16 %v409
    %v485 = vunpack.c.h.b16 %v409
    %v486 = vunpack.c.l.b16 %v410
    %v487 = vunpack.c.h.b16 %v410
    %v488 = vunpack.c.l.b16 %v411
    %v489 = vunpack.c.h.b16 %v411
    %v490 = vunpack.c.l.b16 %v412
    %v491 = vunpack.c.h.b16 %v412
    %v492 = vunpack.c.l.b16 %v413
    %v493 = vunpack.c.h.b16 %v413
    %v494 = vunpack.c.l.b16 %v414
    %v495 = vunpack.c.h.b16 %v414
    %v496 = vunpack.c.l.b16 %v415
    %v497 = vunpack.c.h.b16 %v415
    %v498 = vunpack.c.l.b16 %v416
    %v499 = vunpack.c.h.b16 %v416
    %v500 = vunpack.c.l.b16 %v417
    %v501 = vunpack.c.h.b16 %v417
    %v502 = vunpack.c.l.b16 %v418
    %v503 = vunpack.c.h.b16 %v418
    %v504 = vunpack.c.l.b16 %v419
    %v505 = vunpack.c.h.b16 %v419
    %v506 = vunpack.c.l.b16 %v420
    %v507 = vunpack.c.h.b16 %v420
    %v508 = vunpack.c.l.b16 %v421
    %v509 = vunpack.c.h.b16 %v421
    %v510 = vunpack.c.l.b16 %v422
    %v511 = vunpack.c.h.b16 %v422
    %v512 = vunpack.c.l.b16 %v423
    %v513 = vunpack.c.h.b16 %v423
    %v514 = vunpack.c.l.b16 %v424
    %v515 = vunpack.c.h.b16 %v424
    %v516 = vunpack.c.l.b16 %v425
    %v517 = vunpack.c.h.b16 %v425
    %v518 = vunpack.c.l.b16 %v426
    %v519 = vunpack.c.h.b16 %v426
    %v520 = vunpack.c.l.b16 %v427
    %v521 = vunpack.c.h.b16 %v427
    %v522 = vunpack.c.l.b16 %v428
    %v523 = vunpack.c.h.b16 %v428
    %v524 = vunpack.c.l.b16 %v429
    %v525 = vunpack.c.h.b16 %v429
    %v526 = vunpack.c.l.b16 %v430
    %v527 = vunpack.c.h.b16 %v430
    %v528 = vunpack.c.l.b16 %v431
    %v529 = vunpack.c.h.b16 %v431
    %v530 = vunpack.c.l.b16 %v432
    %v531 = vunpack.c.h.b16 %v432
    %v532 = vunpack.c.l.b16 %v433
    %v533 = vunpack.c.h.b16 %v433
    %v534 = vunpack.c.l.b16 %v434
    %v535 = vunpack.c.h.b16 %v434
    %v536 = vunpack.c.l.b16 %v435
    %v537 = vunpack.c.h.b16 %v435
    %v538 = vunpack.c.l.b16 %v436
    %v539 = vunpack.c.h.b16 %v436
    %v540 = vunpack.c.l.b16 %v437
    %v541 = vunpack.c.h.b16 %v437
    %v542 = vunpack.c.l.b16 %v438
    %v543 = vunpack.c.h.b16 %v438
    %v544 = vunpack.c.l.b16 %v439
    %v545 = vunpack.c.h.b16 %v439
    %v546 = vpack.c.b16 %v486, %v482
    %v547 = vpack.c.b16 %v487, %v483
    %v548 = vpack.c.b16 %v488, %v484
    %v549 = vpack.c.b16 %v489, %v485
    %v550 = vpack.c.b16 %v494, %v490
    %v551 = vpack.c.b16 %v495, %v491
    %v552 = vpack.c.b16 %v496, %v492
    %v553 = vpack.c.b16 %v497, %v493
    %v554 = vpack.c.b16 %v502, %v498
    %v555 = vpack.c.b16 %v503, %v499
    %v556 = vpack.c.b16 %v504, %v500
    %v557 = vpack.c.b16 %v505, %v501
    %v558 = vpack.c.b16 %v510, %v506
    %v559 = vpack.c.b16 %v511, %v507
    %v560 = vpack.c.b16 %v512, %v508
    %v561 = vpack.c.b16 %v513, %v509
    %v562 = vpack.c.b16 %v518, %v514
    %v563 = vpack.c.b16 %v519, %v515
    %v564 = vpack.c.b16 %v520, %v516
    %v565 = vpack.c.b16 %v521, %v517
    %v566 = vpack.c.b16 %v526, %v522
    %v567 = vpack.c.b16 %v527, %v523
    %v568 = vpack.c.b16 %v528, %v524
    %v569 = vpack.c.b16 %v529, %v525
    %v570 = vpack.c.b16 %v534, %v530
    %v571 = vpack.c.b16 %v535, %v531
    %v572 = vpack.c.b16 %v536, %v532
    %v573 = vpack.c.b16 %v537, %v533
    %v574 = vpack.c.b16 %v542, %v538
    %v575 = vpack.c.b16 %v543, %v539
    %v576 = vpack.c.b16 %v544, %v540
    %v577 = vpack.c.b16 %v545, %v541
    %610 = vmatpush.bf16.msra.mxu0 %v574
    %611 = vmatpush.bf16.msra.mxu0 %v570
    %612 = vmatpush.bf16.msra.mxu0 %v566
    %613 = vmatpush.bf16.msra.mxu0 %v562
    %614 = vmatpush.bf16.msra.mxu0 %v558
    %615 = vmatpush.bf16.msra.mxu0 %v554
    %616 = vmatpush.bf16.msra.mxu0 %v550
    %617 = vmatpush.bf16.msra.mxu0 %v546
    %618 = vmatmul.bf16.gmra.mxu0 %v449
    %v619 = vpop.f32.mrf.mxu0
    %v620 = vadd.f32 0.0, %v619
    %v621 = vpop.f32.mrf.mxu0
    %622 = vdwg.mxu0
    %623 = vmatpush.bf16.msra.mxu0 %v575
    %624 = vmatpush.bf16.msra.mxu0 %v571
    %625 = vmatpush.bf16.msra.mxu0 %v567
    %626 = vmatpush.bf16.msra.mxu0 %v563
    %627 = vmatpush.bf16.msra.mxu0 %v559
    %628 = vmatpush.bf16.msra.mxu0 %v555
    %629 = vmatpush.bf16.msra.mxu0 %v551
    %630 = vmatpush.bf16.msra.mxu0 %v547
    %631 = vmatmul.bf16.gmra.mxu0 %v449
    %v632 = vpop.f32.mrf.mxu0
    %v633 = vadd.f32 0.0, %v632
    %v634 = vpop.f32.mrf.mxu0
    %635 = vdwg.mxu0
    %636 = vmatpush.bf16.msra.mxu0 %v576
    %637 = vmatpush.bf16.msra.mxu0 %v572
    %638 = vmatpush.bf16.msra.mxu0 %v568
    %639 = vmatpush.bf16.msra.mxu0 %v564
    %640 = vmatpush.bf16.msra.mxu0 %v560
    %641 = vmatpush.bf16.msra.mxu0 %v556
    %642 = vmatpush.bf16.msra.mxu0 %v552
    %643 = vmatpush.bf16.msra.mxu0 %v548
    %644 = vmatmul.bf16.gmra.mxu0 %v449
    %v645 = vpop.f32.mrf.mxu0
    %v646 = vadd.f32 0.0, %v645
    %v647 = vpop.f32.mrf.mxu0
    %648 = vdwg.mxu0
    %649 = vmatpush.bf16.msra.mxu0 %v577
    %650 = vmatpush.bf16.msra.mxu0 %v573
    %651 = vmatpush.bf16.msra.mxu0 %v569
    %652 = vmatpush.bf16.msra.mxu0 %v565
    %653 = vmatpush.bf16.msra.mxu0 %v561
    %654 = vmatpush.bf16.msra.mxu0 %v557
    %655 = vmatpush.bf16.msra.mxu0 %v553
    %656 = vmatpush.bf16.msra.mxu0 %v549
    %657 = vmatmul.bf16.gmra.mxu0 %v449
    %v658 = vpop.f32.mrf.mxu0
    %v659 = vadd.f32 0.0, %v658
    %v660 = vpop.f32.mrf.mxu0
    %661 = vdwg.mxu0
    %v662 = vadd.f32 %v445, %v620
    %v663 = vadd.f32 %v446, %v633
    %v664 = vadd.f32 %v447, %v646
    %v665 = vadd.f32 %v448, %v659
    %v666 = vxor.u32 %v662, 2147483648
    %v667 = vmul.f32 %v666, 1.442695
    %v668 = vpow.pop %v667
    %v669 = vadd.f32 %v668, 1.0
    %v670 = vrcp.pop %v669
    %v671 = vmul.f32 %v669, %v670
    %v672 = vsub.f32 1.0, %v671
    %v673 = vmul.f32 %v670, %v672
    %v674 = vadd.f32 %v670, %v673
    %vm675 = vweird.f32 %v669
    %vm676 = vweird.f32 %v670
    %vm677 = vmor %vm675, %vm676
    %v678 = vsel %vm677, %v670, %v674
    %v679 = vand.u32 2147483647, %v669
    %vm680 = vcmp.eq.f32.partialorder %v679, 8.507059e+37
    %v681 = vand.u32 %v669, 2147483648
    %v682 = vor.u32 1.1754944e-38, %v681
    %v683 = vsel %vm680, %v682, %v678
    %v684 = vmul.f32 1.0, %v683
    %v685 = vxor.u32 %v663, 2147483648
    %v686 = vmul.f32 %v685, 1.442695
    %v687 = vpow.pop %v686
    %v688 = vadd.f32 %v687, 1.0
    %v689 = vrcp.pop %v688
    %v690 = vmul.f32 %v688, %v689
    %v691 = vsub.f32 1.0, %v690
    %v692 = vmul.f32 %v689, %v691
    %v693 = vadd.f32 %v689, %v692
    %vm694 = vweird.f32 %v688
    %vm695 = vweird.f32 %v689
    %vm696 = vmor %vm694, %vm695
    %v697 = vsel %vm696, %v689, %v693
    %v698 = vand.u32 2147483647, %v688
    %vm699 = vcmp.eq.f32.partialorder %v698, 8.507059e+37
    %v700 = vand.u32 %v688, 2147483648
    %v701 = vor.u32 1.1754944e-38, %v700
    %v702 = vsel %vm699, %v701, %v697
    %v703 = vmul.f32 1.0, %v702
    %v704 = vtanh.pop %v664
    %v705 = vxor.u32 %v665, 2147483648
    %v706 = vmul.f32 %v705, 1.442695
    %v707 = vpow.pop %v706
    %v708 = vadd.f32 %v707, 1.0
    %v709 = vrcp.pop %v708
    %v710 = vmul.f32 %v708, %v709
    %v711 = vsub.f32 1.0, %v710
    %v712 = vmul.f32 %v709, %v711
    %v713 = vadd.f32 %v709, %v712
    %vm714 = vweird.f32 %v708
    %vm715 = vweird.f32 %v709
    %vm716 = vmor %vm714, %vm715
    %v717 = vsel %vm716, %v709, %v713
    %v718 = vand.u32 2147483647, %v708
    %vm719 = vcmp.eq.f32.partialorder %v718, 8.507059e+37
    %v720 = vand.u32 %v708, 2147483648
    %v721 = vor.u32 1.1754944e-38, %v720
    %v722 = vsel %vm719, %v721, %v717
    %v723 = vmul.f32 1.0, %v722
    %v724 = vmul.f32 %v703, %v441
    %v725 = vmul.f32 %v684, %v704
    %v726 = vadd.f32 %v724, %v725
    %v727 = vtanh.pop %v726
    %v728 = vmul.f32 %v723, %v727
    %s729 = smul.u32 1, 4
    %s730 = smul.addr %s729, 8
    %s731 = scalar_lea.vmem [#allocation2], %s730
    %v732 = vld [vmem:[%s731] sm:$0xff]
    %v733 = vld [vmem:[%s731 + $0x8] sm:$0xff]
    %v734 = vld [vmem:[%s731 + $0x10] sm:$0xff]
    %v735 = vld [vmem:[%s731 + $0x18] sm:$0xff]
    %v736 = vpack.c.bf16 %v728, %v728
    %737 = vmatpush.bf16.msra.mxu0 %v574
    %738 = vmatpush.bf16.msra.mxu0 %v570
    %739 = vmatpush.bf16.msra.mxu0 %v566
    %740 = vmatpush.bf16.msra.mxu0 %v562
    %741 = vmatpush.bf16.msra.mxu0 %v558
    %742 = vmatpush.bf16.msra.mxu0 %v554
    %743 = vmatpush.bf16.msra.mxu0 %v550
    %744 = vmatpush.bf16.msra.mxu0 %v546
    %745 = vmatmul.bf16.gmra.mxu0 %v736
    %v746 = vpop.f32.mrf.mxu0
    %v747 = vadd.f32 0.0, %v746
    %v748 = vpop.f32.mrf.mxu0
    %749 = vdwg.mxu0
    %750 = vmatpush.bf16.msra.mxu0 %v575
    %751 = vmatpush.bf16.msra.mxu0 %v571
    %752 = vmatpush.bf16.msra.mxu0 %v567
    %753 = vmatpush.bf16.msra.mxu0 %v563
    %754 = vmatpush.bf16.msra.mxu0 %v559
    %755 = vmatpush.bf16.msra.mxu0 %v555
    %756 = vmatpush.bf16.msra.mxu0 %v551
    %757 = vmatpush.bf16.msra.mxu0 %v547
    %758 = vmatmul.bf16.gmra.mxu0 %v736
    %v759 = vpop.f32.mrf.mxu0
    %v760 = vadd.f32 0.0, %v759
    %v761 = vpop.f32.mrf.mxu0
    %762 = vdwg.mxu0
    %763 = vmatpush.bf16.msra.mxu0 %v576
    %764 = vmatpush.bf16.msra.mxu0 %v572
    %765 = vmatpush.bf16.msra.mxu0 %v568
    %766 = vmatpush.bf16.msra.mxu0 %v564
    %767 = vmatpush.bf16.msra.mxu0 %v560
    %768 = vmatpush.bf16.msra.mxu0 %v556
    %769 = vmatpush.bf16.msra.mxu0 %v552
    %770 = vmatpush.bf16.msra.mxu0 %v548
    %771 = vmatmul.bf16.gmra.mxu0 %v736
    %v772 = vpop.f32.mrf.mxu0
    %v773 = vadd.f32 0.0, %v772
    %v774 = vpop.f32.mrf.mxu0
    %775 = vdwg.mxu0
    %776 = vmatpush.bf16.msra.mxu0 %v577
    %777 = vmatpush.bf16.msra.mxu0 %v573
    %778 = vmatpush.bf16.msra.mxu0 %v569
    %779 = vmatpush.bf16.msra.mxu0 %v565
    %780 = vmatpush.bf16.msra.mxu0 %v561
    %781 = vmatpush.bf16.msra.mxu0 %v557
    %782 = vmatpush.bf16.msra.mxu0 %v553
    %783 = vmatpush.bf16.msra.mxu0 %v549
    %784 = vmatmul.bf16.gmra.mxu0 %v736
    %v785 = vpop.f32.mrf.mxu0
    %v786 = vadd.f32 0.0, %v785
    %v787 = vpop.f32.mrf.mxu0
    %788 = vdwg.mxu0
    %v789 = vadd.f32 %v732, %v747
    %v790 = vadd.f32 %v733, %v760
    %v791 = vadd.f32 %v734, %v773
    %v792 = vadd.f32 %v735, %v786
    %v793 = vxor.u32 %v789, 2147483648
    %v794 = vmul.f32 %v793, 1.442695
    %v795 = vpow.pop %v794
    %v796 = vadd.f32 %v795, 1.0
    %v797 = vrcp.pop %v796
    %v798 = vmul.f32 %v796, %v797
    %v799 = vsub.f32 1.0, %v798
    %v800 = vmul.f32 %v797, %v799
    %v801 = vadd.f32 %v797, %v800
    %vm802 = vweird.f32 %v796
    %vm803 = vweird.f32 %v797
    %vm804 = vmor %vm802, %vm803
    %v805 = vsel %vm804, %v797, %v801
    %v806 = vand.u32 2147483647, %v796
    %vm807 = vcmp.eq.f32.partialorder %v806, 8.507059e+37
    %v808 = vand.u32 %v796, 2147483648
    %v809 = vor.u32 1.1754944e-38, %v808
    %v810 = vsel %vm807, %v809, %v805
    %v811 = vmul.f32 1.0, %v810
    %v812 = vxor.u32 %v790, 2147483648
    %v813 = vmul.f32 %v812, 1.442695
    %v814 = vpow.pop %v813
    %v815 = vadd.f32 %v814, 1.0
    %v816 = vrcp.pop %v815
    %v817 = vmul.f32 %v815, %v816
    %v818 = vsub.f32 1.0, %v817
    %v819 = vmul.f32 %v816, %v818
    %v820 = vadd.f32 %v816, %v819
    %vm821 = vweird.f32 %v815
    %vm822 = vweird.f32 %v816
    %vm823 = vmor %vm821, %vm822
    %v824 = vsel %vm823, %v816, %v820
    %v825 = vand.u32 2147483647, %v815
    %vm826 = vcmp.eq.f32.partialorder %v825, 8.507059e+37
    %v827 = vand.u32 %v815, 2147483648
    %v828 = vor.u32 1.1754944e-38, %v827
    %v829 = vsel %vm826, %v828, %v824
    %v830 = vmul.f32 1.0, %v829
    %v831 = vtanh.pop %v791
    %v832 = vxor.u32 %v792, 2147483648
    %v833 = vmul.f32 %v832, 1.442695
    %v834 = vpow.pop %v833
    %v835 = vadd.f32 %v834, 1.0
    %v836 = vrcp.pop %v835
    %v837 = vmul.f32 %v835, %v836
    %v838 = vsub.f32 1.0, %v837
    %v839 = vmul.f32 %v836, %v838
    %v840 = vadd.f32 %v836, %v839
    %vm841 = vweird.f32 %v835
    %vm842 = vweird.f32 %v836
    %vm843 = vmor %vm841, %vm842
    %v844 = vsel %vm843, %v836, %v840
    %v845 = vand.u32 2147483647, %v835
    %vm846 = vcmp.eq.f32.partialorder %v845, 8.507059e+37
    %v847 = vand.u32 %v835, 2147483648
    %v848 = vor.u32 1.1754944e-38, %v847
    %v849 = vsel %vm846, %v848, %v844
    %v850 = vmul.f32 1.0, %v849
    %v851 = vmul.f32 %v830, %v726
    %v852 = vmul.f32 %v811, %v831
    %v853 = vadd.f32 %v851, %v852
    %v854 = vtanh.pop %v853
    %v855 = vmul.f32 %v850, %v854
    %s856 = smul.u32 2, 4
    %s857 = smul.addr %s856, 8
    %s858 = scalar_lea.vmem [#allocation2], %s857
    %v859 = vld [vmem:[%s858] sm:$0xff]
    %v860 = vld [vmem:[%s858 + $0x8] sm:$0xff]
    %v861 = vld [vmem:[%s858 + $0x10] sm:$0xff]
    %v862 = vld [vmem:[%s858 + $0x18] sm:$0xff]
    %v863 = vpack.c.bf16 %v855, %v855
    %864 = vmatpush.bf16.msra.mxu0 %v574
    %865 = vmatpush.bf16.msra.mxu0 %v570
    %866 = vmatpush.bf16.msra.mxu0 %v566
    %867 = vmatpush.bf16.msra.mxu0 %v562
    %868 = vmatpush.bf16.msra.mxu0 %v558
    %869 = vmatpush.bf16.msra.mxu0 %v554
    %870 = vmatpush.bf16.msra.mxu0 %v550
    %871 = vmatpush.bf16.msra.mxu0 %v546
    %872 = vmatmul.bf16.gmra.mxu0 %v863
    %v873 = vpop.f32.mrf.mxu0
    %v874 = vadd.f32 0.0, %v873
    %v875 = vpop.f32.mrf.mxu0
    %876 = vdwg.mxu0
    %877 = vmatpush.bf16.msra.mxu0 %v575
    %878 = vmatpush.bf16.msra.mxu0 %v571
    %879 = vmatpush.bf16.msra.mxu0 %v567
    %880 = vmatpush.bf16.msra.mxu0 %v563
    %881 = vmatpush.bf16.msra.mxu0 %v559
    %882 = vmatpush.bf16.msra.mxu0 %v555
    %883 = vmatpush.bf16.msra.mxu0 %v551
    %884 = vmatpush.bf16.msra.mxu0 %v547
    %885 = vmatmul.bf16.gmra.mxu0 %v863
    %v886 = vpop.f32.mrf.mxu0
    %v887 = vadd.f32 0.0, %v886
    %v888 = vpop.f32.mrf.mxu0
    %889 = vdwg.mxu0
    %890 = vmatpush.bf16.msra.mxu0 %v576
    %891 = vmatpush.bf16.msra.mxu0 %v572
    %892 = vmatpush.bf16.msra.mxu0 %v568
    %893 = vmatpush.bf16.msra.mxu0 %v564
    %894 = vmatpush.bf16.msra.mxu0 %v560
    %895 = vmatpush.bf16.msra.mxu0 %v556
    %896 = vmatpush.bf16.msra.mxu0 %v552
    %897 = vmatpush.bf16.msra.mxu0 %v548
    %898 = vmatmul.bf16.gmra.mxu0 %v863
    %v899 = vpop.f32.mrf.mxu0
    %v900 = vadd.f32 0.0, %v899
    %v901 = vpop.f32.mrf.mxu0
    %902 = vdwg.mxu0
    %903 = vmatpush.bf16.msra.mxu0 %v577
    %904 = vmatpush.bf16.msra.mxu0 %v573
    %905 = vmatpush.bf16.msra.mxu0 %v569
    %906 = vmatpush.bf16.msra.mxu0 %v565
    %907 = vmatpush.bf16.msra.mxu0 %v561
    %908 = vmatpush.bf16.msra.mxu0 %v557
    %909 = vmatpush.bf16.msra.mxu0 %v553
    %910 = vmatpush.bf16.msra.mxu0 %v549
    %911 = vmatmul.bf16.gmra.mxu0 %v863
    %v912 = vpop.f32.mrf.mxu0
    %v913 = vadd.f32 0.0, %v912
    %v914 = vpop.f32.mrf.mxu0
    %915 = vdwg.mxu0
    %v916 = vadd.f32 %v859, %v874
    %v917 = vadd.f32 %v860, %v887
    %v918 = vadd.f32 %v861, %v900
    %v919 = vadd.f32 %v862, %v913
    %v920 = vxor.u32 %v916, 2147483648
    %v921 = vmul.f32 %v920, 1.442695
    %v922 = vpow.pop %v921
    %v923 = vadd.f32 %v922, 1.0
    %v924 = vrcp.pop %v923
    %v925 = vmul.f32 %v923, %v924
    %v926 = vsub.f32 1.0, %v925
    %v927 = vmul.f32 %v924, %v926
    %v928 = vadd.f32 %v924, %v927
    %vm929 = vweird.f32 %v923
    %vm930 = vweird.f32 %v924
    %vm931 = vmor %vm929, %vm930
    %v932 = vsel %vm931, %v924, %v928
    %v933 = vand.u32 2147483647, %v923
    %vm934 = vcmp.eq.f32.partialorder %v933, 8.507059e+37
    %v935 = vand.u32 %v923, 2147483648
    %v936 = vor.u32 1.1754944e-38, %v935
    %v937 = vsel %vm934, %v936, %v932
    %v938 = vmul.f32 1.0, %v937
    %v939 = vxor.u32 %v917, 2147483648
    %v940 = vmul.f32 %v939, 1.442695
    %v941 = vpow.pop %v940
    %v942 = vadd.f32 %v941, 1.0
    %v943 = vrcp.pop %v942
    %v944 = vmul.f32 %v942, %v943
    %v945 = vsub.f32 1.0, %v944
    %v946 = vmul.f32 %v943, %v945
    %v947 = vadd.f32 %v943, %v946
    %vm948 = vweird.f32 %v942
    %vm949 = vweird.f32 %v943
    %vm950 = vmor %vm948, %vm949
    %v951 = vsel %vm950, %v943, %v947
    %v952 = vand.u32 2147483647, %v942
    %vm953 = vcmp.eq.f32.partialorder %v952, 8.507059e+37
    %v954 = vand.u32 %v942, 2147483648
    %v955 = vor.u32 1.1754944e-38, %v954
    %v956 = vsel %vm953, %v955, %v951
    %v957 = vmul.f32 1.0, %v956
    %v958 = vtanh.pop %v918
    %v959 = vxor.u32 %v919, 2147483648
    %v960 = vmul.f32 %v959, 1.442695
    %v961 = vpow.pop %v960
    %v962 = vadd.f32 %v961, 1.0
    %v963 = vrcp.pop %v962
    %v964 = vmul.f32 %v962, %v963
    %v965 = vsub.f32 1.0, %v964
    %v966 = vmul.f32 %v963, %v965
    %v967 = vadd.f32 %v963, %v966
    %vm968 = vweird.f32 %v962
    %vm969 = vweird.f32 %v963
    %vm970 = vmor %vm968, %vm969
    %v971 = vsel %vm970, %v963, %v967
    %v972 = vand.u32 2147483647, %v962
    %vm973 = vcmp.eq.f32.partialorder %v972, 8.507059e+37
    %v974 = vand.u32 %v962, 2147483648
    %v975 = vor.u32 1.1754944e-38, %v974
    %v976 = vsel %vm973, %v975, %v971
    %v977 = vmul.f32 1.0, %v976
    %v978 = vmul.f32 %v957, %v853
    %v979 = vmul.f32 %v938, %v958
    %v980 = vadd.f32 %v978, %v979
    %v981 = vtanh.pop %v980
    %v982 = vmul.f32 %v977, %v981
    %s983 = smul.u32 3, 4
    %s984 = smul.addr %s983, 8
    %s985 = scalar_lea.vmem [#allocation2], %s984
    %v986 = vld [vmem:[%s985] sm:$0xff]
    %v987 = vld [vmem:[%s985 + $0x8] sm:$0xff]
    %v988 = vld [vmem:[%s985 + $0x10] sm:$0xff]
    %v989 = vld [vmem:[%s985 + $0x18] sm:$0xff]
    %v990 = vpack.c.bf16 %v982, %v982
    %991 = vmatpush.bf16.msra.mxu0 %v574
    %992 = vmatpush.bf16.msra.mxu0 %v570
    %993 = vmatpush.bf16.msra.mxu0 %v566
    %994 = vmatpush.bf16.msra.mxu0 %v562
    %995 = vmatpush.bf16.msra.mxu0 %v558
    %996 = vmatpush.bf16.msra.mxu0 %v554
    %997 = vmatpush.bf16.msra.mxu0 %v550
    %998 = vmatpush.bf16.msra.mxu0 %v546
    %999 = vmatmul.bf16.gmra.mxu0 %v990
    %v1000 = vpop.f32.mrf.mxu0
    %v1001 = vadd.f32 0.0, %v1000
    %v1002 = vpop.f32.mrf.mxu0
    %1003 = vdwg.mxu0
    %1004 = vmatpush.bf16.msra.mxu0 %v575
    %1005 = vmatpush.bf16.msra.mxu0 %v571
    %1006 = vmatpush.bf16.msra.mxu0 %v567
    %1007 = vmatpush.bf16.msra.mxu0 %v563
    %1008 = vmatpush.bf16.msra.mxu0 %v559
    %1009 = vmatpush.bf16.msra.mxu0 %v555
    %1010 = vmatpush.bf16.msra.mxu0 %v551
    %1011 = vmatpush.bf16.msra.mxu0 %v547
    %1012 = vmatmul.bf16.gmra.mxu0 %v990
    %v1013 = vpop.f32.mrf.mxu0
    %v1014 = vadd.f32 0.0, %v1013
    %v1015 = vpop.f32.mrf.mxu0
    %1016 = vdwg.mxu0
    %1017 = vmatpush.bf16.msra.mxu0 %v576
    %1018 = vmatpush.bf16.msra.mxu0 %v572
    %1019 = vmatpush.bf16.msra.mxu0 %v568
    %1020 = vmatpush.bf16.msra.mxu0 %v564
    %1021 = vmatpush.bf16.msra.mxu0 %v560
    %1022 = vmatpush.bf16.msra.mxu0 %v556
    %1023 = vmatpush.bf16.msra.mxu0 %v552
    %1024 = vmatpush.bf16.msra.mxu0 %v548
    %1025 = vmatmul.bf16.gmra.mxu0 %v990
    %v1026 = vpop.f32.mrf.mxu0
    %v1027 = vadd.f32 0.0, %v1026
    %v1028 = vpop.f32.mrf.mxu0
    %1029 = vdwg.mxu0
    %1030 = vmatpush.bf16.msra.mxu0 %v577
    %1031 = vmatpush.bf16.msra.mxu0 %v573
    %1032 = vmatpush.bf16.msra.mxu0 %v569
    %1033 = vmatpush.bf16.msra.mxu0 %v565
    %1034 = vmatpush.bf16.msra.mxu0 %v561
    %1035 = vmatpush.bf16.msra.mxu0 %v557
    %1036 = vmatpush.bf16.msra.mxu0 %v553
    %1037 = vmatpush.bf16.msra.mxu0 %v549
    %1038 = vmatmul.bf16.gmra.mxu0 %v990
    %v1039 = vpop.f32.mrf.mxu0
    %v1040 = vadd.f32 0.0, %v1039
    %v1041 = vpop.f32.mrf.mxu0
    %1042 = vdwg.mxu0
    %v1043 = vadd.f32 %v986, %v1001
    %v1044 = vadd.f32 %v987, %v1014
    %v1045 = vadd.f32 %v988, %v1027
    %v1046 = vadd.f32 %v989, %v1040
    %v1047 = vxor.u32 %v1043, 2147483648
    %v1048 = vmul.f32 %v1047, 1.442695
    %v1049 = vpow.pop %v1048
    %v1050 = vadd.f32 %v1049, 1.0
    %v1051 = vrcp.pop %v1050
    %v1052 = vmul.f32 %v1050, %v1051
    %v1053 = vsub.f32 1.0, %v1052
    %v1054 = vmul.f32 %v1051, %v1053
    %v1055 = vadd.f32 %v1051, %v1054
    %vm1056 = vweird.f32 %v1050
    %vm1057 = vweird.f32 %v1051
    %vm1058 = vmor %vm1056, %vm1057
    %v1059 = vsel %vm1058, %v1051, %v1055
    %v1060 = vand.u32 2147483647, %v1050
    %vm1061 = vcmp.eq.f32.partialorder %v1060, 8.507059e+37
    %v1062 = vand.u32 %v1050, 2147483648
    %v1063 = vor.u32 1.1754944e-38, %v1062
    %v1064 = vsel %vm1061, %v1063, %v1059
    %v1065 = vmul.f32 1.0, %v1064
    %v1066 = vxor.u32 %v1044, 2147483648
    %v1067 = vmul.f32 %v1066, 1.442695
    %v1068 = vpow.pop %v1067
    %v1069 = vadd.f32 %v1068, 1.0
    %v1070 = vrcp.pop %v1069
    %v1071 = vmul.f32 %v1069, %v1070
    %v1072 = vsub.f32 1.0, %v1071
    %v1073 = vmul.f32 %v1070, %v1072
    %v1074 = vadd.f32 %v1070, %v1073
    %vm1075 = vweird.f32 %v1069
    %vm1076 = vweird.f32 %v1070
    %vm1077 = vmor %vm1075, %vm1076
    %v1078 = vsel %vm1077, %v1070, %v1074
    %v1079 = vand.u32 2147483647, %v1069
    %vm1080 = vcmp.eq.f32.partialorder %v1079, 8.507059e+37
    %v1081 = vand.u32 %v1069, 2147483648
    %v1082 = vor.u32 1.1754944e-38, %v1081
    %v1083 = vsel %vm1080, %v1082, %v1078
    %v1084 = vmul.f32 1.0, %v1083
    %v1085 = vtanh.pop %v1045
    %v1086 = vxor.u32 %v1046, 2147483648
    %v1087 = vmul.f32 %v1086, 1.442695
    %v1088 = vpow.pop %v1087
    %v1089 = vadd.f32 %v1088, 1.0
    %v1090 = vrcp.pop %v1089
    %v1091 = vmul.f32 %v1089, %v1090
    %v1092 = vsub.f32 1.0, %v1091
    %v1093 = vmul.f32 %v1090, %v1092
    %v1094 = vadd.f32 %v1090, %v1093
    %vm1095 = vweird.f32 %v1089
    %vm1096 = vweird.f32 %v1090
    %vm1097 = vmor %vm1095, %vm1096
    %v1098 = vsel %vm1097, %v1090, %v1094
    %v1099 = vand.u32 2147483647, %v1089
    %vm1100 = vcmp.eq.f32.partialorder %v1099, 8.507059e+37
    %v1101 = vand.u32 %v1089, 2147483648
    %v1102 = vor.u32 1.1754944e-38, %v1101
    %v1103 = vsel %vm1100, %v1102, %v1098
    %v1104 = vmul.f32 1.0, %v1103
    %v1105 = vmul.f32 %v1084, %v980
    %v1106 = vmul.f32 %v1065, %v1085
    %v1107 = vadd.f32 %v1105, %v1106
    %v1108 = vtanh.pop %v1107
    %v1109 = vmul.f32 %v1104, %v1108
    %s1110 = smul.u32 4, 4
    %s1111 = smul.addr %s1110, 8
    %s1112 = scalar_lea.vmem [#allocation2], %s1111
    %v1113 = vld [vmem:[%s1112] sm:$0xff]
    %v1114 = vld [vmem:[%s1112 + $0x8] sm:$0xff]
    %v1115 = vld [vmem:[%s1112 + $0x10] sm:$0xff]
    %v1116 = vld [vmem:[%s1112 + $0x18] sm:$0xff]
    %v1117 = vpack.c.bf16 %v1109, %v1109
    %1118 = vmatpush.bf16.msra.mxu0 %v574
    %1119 = vmatpush.bf16.msra.mxu0 %v570
    %1120 = vmatpush.bf16.msra.mxu0 %v566
    %1121 = vmatpush.bf16.msra.mxu0 %v562
    %1122 = vmatpush.bf16.msra.mxu0 %v558
    %1123 = vmatpush.bf16.msra.mxu0 %v554
    %1124 = vmatpush.bf16.msra.mxu0 %v550
    %1125 = vmatpush.bf16.msra.mxu0 %v546
    %1126 = vmatmul.bf16.gmra.mxu0 %v1117
    %v1127 = vpop.f32.mrf.mxu0
    %v1128 = vadd.f32 0.0, %v1127
    %v1129 = vpop.f32.mrf.mxu0
    %1130 = vdwg.mxu0
    %1131 = vmatpush.bf16.msra.mxu0 %v575
    %1132 = vmatpush.bf16.msra.mxu0 %v571
    %1133 = vmatpush.bf16.msra.mxu0 %v567
    %1134 = vmatpush.bf16.msra.mxu0 %v563
    %1135 = vmatpush.bf16.msra.mxu0 %v559
    %1136 = vmatpush.bf16.msra.mxu0 %v555
    %1137 = vmatpush.bf16.msra.mxu0 %v551
    %1138 = vmatpush.bf16.msra.mxu0 %v547
    %1139 = vmatmul.bf16.gmra.mxu0 %v1117
    %v1140 = vpop.f32.mrf.mxu0
    %v1141 = vadd.f32 0.0, %v1140
    %v1142 = vpop.f32.mrf.mxu0
    %1143 = vdwg.mxu0
    %1144 = vmatpush.bf16.msra.mxu0 %v576
    %1145 = vmatpush.bf16.msra.mxu0 %v572
    %1146 = vmatpush.bf16.msra.mxu0 %v568
    %1147 = vmatpush.bf16.msra.mxu0 %v564
    %1148 = vmatpush.bf16.msra.mxu0 %v560
    %1149 = vmatpush.bf16.msra.mxu0 %v556
    %1150 = vmatpush.bf16.msra.mxu0 %v552
    %1151 = vmatpush.bf16.msra.mxu0 %v548
    %1152 = vmatmul.bf16.gmra.mxu0 %v1117
    %v1153 = vpop.f32.mrf.mxu0
    %v1154 = vadd.f32 0.0, %v1153
    %v1155 = vpop.f32.mrf.mxu0
    %1156 = vdwg.mxu0
    %1157 = vmatpush.bf16.msra.mxu0 %v577
    %1158 = vmatpush.bf16.msra.mxu0 %v573
    %1159 = vmatpush.bf16.msra.mxu0 %v569
    %1160 = vmatpush.bf16.msra.mxu0 %v565
    %1161 = vmatpush.bf16.msra.mxu0 %v561
    %1162 = vmatpush.bf16.msra.mxu0 %v557
    %1163 = vmatpush.bf16.msra.mxu0 %v553
    %1164 = vmatpush.bf16.msra.mxu0 %v549
    %1165 = vmatmul.bf16.gmra.mxu0 %v1117
    %v1166 = vpop.f32.mrf.mxu0
    %v1167 = vadd.f32 0.0, %v1166
    %v1168 = vpop.f32.mrf.mxu0
    %1169 = vdwg.mxu0
    %v1170 = vadd.f32 %v1113, %v1128
    %v1171 = vadd.f32 %v1114, %v1141
    %v1172 = vadd.f32 %v1115, %v1154
    %v1173 = vadd.f32 %v1116, %v1167
    %v1174 = vxor.u32 %v1170, 2147483648
    %v1175 = vmul.f32 %v1174, 1.442695
    %v1176 = vpow.pop %v1175
    %v1177 = vadd.f32 %v1176, 1.0
    %v1178 = vrcp.pop %v1177
    %v1179 = vmul.f32 %v1177, %v1178
    %v1180 = vsub.f32 1.0, %v1179
    %v1181 = vmul.f32 %v1178, %v1180
    %v1182 = vadd.f32 %v1178, %v1181
    %vm1183 = vweird.f32 %v1177
    %vm1184 = vweird.f32 %v1178
    %vm1185 = vmor %vm1183, %vm1184
    %v1186 = vsel %vm1185, %v1178, %v1182
    %v1187 = vand.u32 2147483647, %v1177
    %vm1188 = vcmp.eq.f32.partialorder %v1187, 8.507059e+37
    %v1189 = vand.u32 %v1177, 2147483648
    %v1190 = vor.u32 1.1754944e-38, %v1189
    %v1191 = vsel %vm1188, %v1190, %v1186
    %v1192 = vmul.f32 1.0, %v1191
    %v1193 = vxor.u32 %v1171, 2147483648
    %v1194 = vmul.f32 %v1193, 1.442695
    %v1195 = vpow.pop %v1194
    %v1196 = vadd.f32 %v1195, 1.0
    %v1197 = vrcp.pop %v1196
    %v1198 = vmul.f32 %v1196, %v1197
    %v1199 = vsub.f32 1.0, %v1198
    %v1200 = vmul.f32 %v1197, %v1199
    %v1201 = vadd.f32 %v1197, %v1200
    %vm1202 = vweird.f32 %v1196
    %vm1203 = vweird.f32 %v1197
    %vm1204 = vmor %vm1202, %vm1203
    %v1205 = vsel %vm1204, %v1197, %v1201
    %v1206 = vand.u32 2147483647, %v1196
    %vm1207 = vcmp.eq.f32.partialorder %v1206, 8.507059e+37
    %v1208 = vand.u32 %v1196, 2147483648
    %v1209 = vor.u32 1.1754944e-38, %v1208
    %v1210 = vsel %vm1207, %v1209, %v1205
    %v1211 = vmul.f32 1.0, %v1210
    %v1212 = vtanh.pop %v1172
    %v1213 = vxor.u32 %v1173, 2147483648
    %v1214 = vmul.f32 %v1213, 1.442695
    %v1215 = vpow.pop %v1214
    %v1216 = vadd.f32 %v1215, 1.0
    %v1217 = vrcp.pop %v1216
    %v1218 = vmul.f32 %v1216, %v1217
    %v1219 = vsub.f32 1.0, %v1218
    %v1220 = vmul.f32 %v1217, %v1219
    %v1221 = vadd.f32 %v1217, %v1220
    %vm1222 = vweird.f32 %v1216
    %vm1223 = vweird.f32 %v1217
    %vm1224 = vmor %vm1222, %vm1223
    %v1225 = vsel %vm1224, %v1217, %v1221
    %v1226 = vand.u32 2147483647, %v1216
    %vm1227 = vcmp.eq.f32.partialorder %v1226, 8.507059e+37
    %v1228 = vand.u32 %v1216, 2147483648
    %v1229 = vor.u32 1.1754944e-38, %v1228
    %v1230 = vsel %vm1227, %v1229, %v1225
    %v1231 = vmul.f32 1.0, %v1230
    %v1232 = vmul.f32 %v1211, %v1107
    %v1233 = vmul.f32 %v1192, %v1212
    %v1234 = vadd.f32 %v1232, %v1233
    %v1235 = vtanh.pop %v1234
    %v1236 = vmul.f32 %v1231, %v1235
    %s1237 = smul.u32 5, 4
    %s1238 = smul.addr %s1237, 8
    %s1239 = scalar_lea.vmem [#allocation2], %s1238
    %v1240 = vld [vmem:[%s1239] sm:$0xff]
    %v1241 = vld [vmem:[%s1239 + $0x8] sm:$0xff]
    %v1242 = vld [vmem:[%s1239 + $0x10] sm:$0xff]
    %v1243 = vld [vmem:[%s1239 + $0x18] sm:$0xff]
    %v1244 = vpack.c.bf16 %v1236, %v1236
    %1245 = vmatpush.bf16.msra.mxu0 %v574
    %1246 = vmatpush.bf16.msra.mxu0 %v570
    %1247 = vmatpush.bf16.msra.mxu0 %v566
    %1248 = vmatpush.bf16.msra.mxu0 %v562
    %1249 = vmatpush.bf16.msra.mxu0 %v558
    %1250 = vmatpush.bf16.msra.mxu0 %v554
    %1251 = vmatpush.bf16.msra.mxu0 %v550
    %1252 = vmatpush.bf16.msra.mxu0 %v546
    %1253 = vmatmul.bf16.gmra.mxu0 %v1244
    %v1254 = vpop.f32.mrf.mxu0
    %v1255 = vadd.f32 0.0, %v1254
    %v1256 = vpop.f32.mrf.mxu0
    %1257 = vdwg.mxu0
    %1258 = vmatpush.bf16.msra.mxu0 %v575
    %1259 = vmatpush.bf16.msra.mxu0 %v571
    %1260 = vmatpush.bf16.msra.mxu0 %v567
    %1261 = vmatpush.bf16.msra.mxu0 %v563
    %1262 = vmatpush.bf16.msra.mxu0 %v559
    %1263 = vmatpush.bf16.msra.mxu0 %v555
    %1264 = vmatpush.bf16.msra.mxu0 %v551
    %1265 = vmatpush.bf16.msra.mxu0 %v547
    %1266 = vmatmul.bf16.gmra.mxu0 %v1244
    %v1267 = vpop.f32.mrf.mxu0
    %v1268 = vadd.f32 0.0, %v1267
    %v1269 = vpop.f32.mrf.mxu0
    %1270 = vdwg.mxu0
    %1271 = vmatpush.bf16.msra.mxu0 %v576
    %1272 = vmatpush.bf16.msra.mxu0 %v572
    %1273 = vmatpush.bf16.msra.mxu0 %v568
    %1274 = vmatpush.bf16.msra.mxu0 %v564
    %1275 = vmatpush.bf16.msra.mxu0 %v560
    %1276 = vmatpush.bf16.msra.mxu0 %v556
    %1277 = vmatpush.bf16.msra.mxu0 %v552
    %1278 = vmatpush.bf16.msra.mxu0 %v548
    %1279 = vmatmul.bf16.gmra.mxu0 %v1244
    %v1280 = vpop.f32.mrf.mxu0
    %v1281 = vadd.f32 0.0, %v1280
    %v1282 = vpop.f32.mrf.mxu0
    %1283 = vdwg.mxu0
    %1284 = vmatpush.bf16.msra.mxu0 %v577
    %1285 = vmatpush.bf16.msra.mxu0 %v573
    %1286 = vmatpush.bf16.msra.mxu0 %v569
    %1287 = vmatpush.bf16.msra.mxu0 %v565
    %1288 = vmatpush.bf16.msra.mxu0 %v561
    %1289 = vmatpush.bf16.msra.mxu0 %v557
    %1290 = vmatpush.bf16.msra.mxu0 %v553
    %1291 = vmatpush.bf16.msra.mxu0 %v549
    %1292 = vmatmul.bf16.gmra.mxu0 %v1244
    %v1293 = vpop.f32.mrf.mxu0
    %v1294 = vadd.f32 0.0, %v1293
    %v1295 = vpop.f32.mrf.mxu0
    %1296 = vdwg.mxu0
    %v1297 = vadd.f32 %v1240, %v1255
    %v1298 = vadd.f32 %v1241, %v1268
    %v1299 = vadd.f32 %v1242, %v1281
    %v1300 = vadd.f32 %v1243, %v1294
    %v1301 = vxor.u32 %v1297, 2147483648
    %v1302 = vmul.f32 %v1301, 1.442695
    %v1303 = vpow.pop %v1302
    %v1304 = vadd.f32 %v1303, 1.0
    %v1305 = vrcp.pop %v1304
    %v1306 = vmul.f32 %v1304, %v1305
    %v1307 = vsub.f32 1.0, %v1306
    %v1308 = vmul.f32 %v1305, %v1307
    %v1309 = vadd.f32 %v1305, %v1308
    %vm1310 = vweird.f32 %v1304
    %vm1311 = vweird.f32 %v1305
    %vm1312 = vmor %vm1310, %vm1311
    %v1313 = vsel %vm1312, %v1305, %v1309
    %v1314 = vand.u32 2147483647, %v1304
    %vm1315 = vcmp.eq.f32.partialorder %v1314, 8.507059e+37
    %v1316 = vand.u32 %v1304, 2147483648
    %v1317 = vor.u32 1.1754944e-38, %v1316
    %v1318 = vsel %vm1315, %v1317, %v1313
    %v1319 = vmul.f32 1.0, %v1318
    %v1320 = vxor.u32 %v1298, 2147483648
    %v1321 = vmul.f32 %v1320, 1.442695
    %v1322 = vpow.pop %v1321
    %v1323 = vadd.f32 %v1322, 1.0
    %v1324 = vrcp.pop %v1323
    %v1325 = vmul.f32 %v1323, %v1324
    %v1326 = vsub.f32 1.0, %v1325
    %v1327 = vmul.f32 %v1324, %v1326
    %v1328 = vadd.f32 %v1324, %v1327
    %vm1329 = vweird.f32 %v1323
    %vm1330 = vweird.f32 %v1324
    %vm1331 = vmor %vm1329, %vm1330
    %v1332 = vsel %vm1331, %v1324, %v1328
    %v1333 = vand.u32 2147483647, %v1323
    %vm1334 = vcmp.eq.f32.partialorder %v1333, 8.507059e+37
    %v1335 = vand.u32 %v1323, 2147483648
    %v1336 = vor.u32 1.1754944e-38, %v1335
    %v1337 = vsel %vm1334, %v1336, %v1332
    %v1338 = vmul.f32 1.0, %v1337
    %v1339 = vtanh.pop %v1299
    %v1340 = vxor.u32 %v1300, 2147483648
    %v1341 = vmul.f32 %v1340, 1.442695
    %v1342 = vpow.pop %v1341
    %v1343 = vadd.f32 %v1342, 1.0
    %v1344 = vrcp.pop %v1343
    %v1345 = vmul.f32 %v1343, %v1344
    %v1346 = vsub.f32 1.0, %v1345
    %v1347 = vmul.f32 %v1344, %v1346
    %v1348 = vadd.f32 %v1344, %v1347
    %vm1349 = vweird.f32 %v1343
    %vm1350 = vweird.f32 %v1344
    %vm1351 = vmor %vm1349, %vm1350
    %v1352 = vsel %vm1351, %v1344, %v1348
    %v1353 = vand.u32 2147483647, %v1343
    %vm1354 = vcmp.eq.f32.partialorder %v1353, 8.507059e+37
    %v1355 = vand.u32 %v1343, 2147483648
    %v1356 = vor.u32 1.1754944e-38, %v1355
    %v1357 = vsel %vm1354, %v1356, %v1352
    %v1358 = vmul.f32 1.0, %v1357
    %v1359 = vmul.f32 %v1338, %v1234
    %v1360 = vmul.f32 %v1319, %v1339
    %v1361 = vadd.f32 %v1359, %v1360
    %v1362 = vtanh.pop %v1361
    %v1363 = vmul.f32 %v1358, %v1362
    %s1364 = smul.u32 6, 4
    %s1365 = smul.addr %s1364, 8
    %s1366 = scalar_lea.vmem [#allocation2], %s1365
    %v1367 = vld [vmem:[%s1366] sm:$0xff]
    %v1368 = vld [vmem:[%s1366 + $0x8] sm:$0xff]
    %v1369 = vld [vmem:[%s1366 + $0x10] sm:$0xff]
    %v1370 = vld [vmem:[%s1366 + $0x18] sm:$0xff]
    %v1371 = vpack.c.bf16 %v1363, %v1363
    %1372 = vmatpush.bf16.msra.mxu0 %v574
    %1373 = vmatpush.bf16.msra.mxu0 %v570
    %1374 = vmatpush.bf16.msra.mxu0 %v566
    %1375 = vmatpush.bf16.msra.mxu0 %v562
    %1376 = vmatpush.bf16.msra.mxu0 %v558
    %1377 = vmatpush.bf16.msra.mxu0 %v554
    %1378 = vmatpush.bf16.msra.mxu0 %v550
    %1379 = vmatpush.bf16.msra.mxu0 %v546
    %1380 = vmatmul.bf16.gmra.mxu0 %v1371
    %v1381 = vpop.f32.mrf.mxu0
    %v1382 = vadd.f32 0.0, %v1381
    %v1383 = vpop.f32.mrf.mxu0
    %1384 = vdwg.mxu0
    %1385 = vmatpush.bf16.msra.mxu0 %v575
    %1386 = vmatpush.bf16.msra.mxu0 %v571
    %1387 = vmatpush.bf16.msra.mxu0 %v567
    %1388 = vmatpush.bf16.msra.mxu0 %v563
    %1389 = vmatpush.bf16.msra.mxu0 %v559
    %1390 = vmatpush.bf16.msra.mxu0 %v555
    %1391 = vmatpush.bf16.msra.mxu0 %v551
    %1392 = vmatpush.bf16.msra.mxu0 %v547
    %1393 = vmatmul.bf16.gmra.mxu0 %v1371
    %v1394 = vpop.f32.mrf.mxu0
    %v1395 = vadd.f32 0.0, %v1394
    %v1396 = vpop.f32.mrf.mxu0
    %1397 = vdwg.mxu0
    %1398 = vmatpush.bf16.msra.mxu0 %v576
    %1399 = vmatpush.bf16.msra.mxu0 %v572
    %1400 = vmatpush.bf16.msra.mxu0 %v568
    %1401 = vmatpush.bf16.msra.mxu0 %v564
    %1402 = vmatpush.bf16.msra.mxu0 %v560
    %1403 = vmatpush.bf16.msra.mxu0 %v556
    %1404 = vmatpush.bf16.msra.mxu0 %v552
    %1405 = vmatpush.bf16.msra.mxu0 %v548
    %1406 = vmatmul.bf16.gmra.mxu0 %v1371
    %v1407 = vpop.f32.mrf.mxu0
    %v1408 = vadd.f32 0.0, %v1407
    %v1409 = vpop.f32.mrf.mxu0
    %1410 = vdwg.mxu0
    %1411 = vmatpush.bf16.msra.mxu0 %v577
    %1412 = vmatpush.bf16.msra.mxu0 %v573
    %1413 = vmatpush.bf16.msra.mxu0 %v569
    %1414 = vmatpush.bf16.msra.mxu0 %v565
    %1415 = vmatpush.bf16.msra.mxu0 %v561
    %1416 = vmatpush.bf16.msra.mxu0 %v557
    %1417 = vmatpush.bf16.msra.mxu0 %v553
    %1418 = vmatpush.bf16.msra.mxu0 %v549
    %1419 = vmatmul.bf16.gmra.mxu0 %v1371
    %v1420 = vpop.f32.mrf.mxu0
    %v1421 = vadd.f32 0.0, %v1420
    %v1422 = vpop.f32.mrf.mxu0
    %1423 = vdwg.mxu0
    %v1424 = vadd.f32 %v1367, %v1382
    %v1425 = vadd.f32 %v1368, %v1395
    %v1426 = vadd.f32 %v1369, %v1408
    %v1427 = vadd.f32 %v1370, %v1421
    %v1428 = vxor.u32 %v1424, 2147483648
    %v1429 = vmul.f32 %v1428, 1.442695
    %v1430 = vpow.pop %v1429
    %v1431 = vadd.f32 %v1430, 1.0
    %v1432 = vrcp.pop %v1431
    %v1433 = vmul.f32 %v1431, %v1432
    %v1434 = vsub.f32 1.0, %v1433
    %v1435 = vmul.f32 %v1432, %v1434
    %v1436 = vadd.f32 %v1432, %v1435
    %vm1437 = vweird.f32 %v1431
    %vm1438 = vweird.f32 %v1432
    %vm1439 = vmor %vm1437, %vm1438
    %v1440 = vsel %vm1439, %v1432, %v1436
    %v1441 = vand.u32 2147483647, %v1431
    %vm1442 = vcmp.eq.f32.partialorder %v1441, 8.507059e+37
    %v1443 = vand.u32 %v1431, 2147483648
    %v1444 = vor.u32 1.1754944e-38, %v1443
    %v1445 = vsel %vm1442, %v1444, %v1440
    %v1446 = vmul.f32 1.0, %v1445
    %v1447 = vxor.u32 %v1425, 2147483648
    %v1448 = vmul.f32 %v1447, 1.442695
    %v1449 = vpow.pop %v1448
    %v1450 = vadd.f32 %v1449, 1.0
    %v1451 = vrcp.pop %v1450
    %v1452 = vmul.f32 %v1450, %v1451
    %v1453 = vsub.f32 1.0, %v1452
    %v1454 = vmul.f32 %v1451, %v1453
    %v1455 = vadd.f32 %v1451, %v1454
    %vm1456 = vweird.f32 %v1450
    %vm1457 = vweird.f32 %v1451
    %vm1458 = vmor %vm1456, %vm1457
    %v1459 = vsel %vm1458, %v1451, %v1455
    %v1460 = vand.u32 2147483647, %v1450
    %vm1461 = vcmp.eq.f32.partialorder %v1460, 8.507059e+37
    %v1462 = vand.u32 %v1450, 2147483648
    %v1463 = vor.u32 1.1754944e-38, %v1462
    %v1464 = vsel %vm1461, %v1463, %v1459
    %v1465 = vmul.f32 1.0, %v1464
    %v1466 = vtanh.pop %v1426
    %v1467 = vxor.u32 %v1427, 2147483648
    %v1468 = vmul.f32 %v1467, 1.442695
    %v1469 = vpow.pop %v1468
    %v1470 = vadd.f32 %v1469, 1.0
    %v1471 = vrcp.pop %v1470
    %v1472 = vmul.f32 %v1470, %v1471
    %v1473 = vsub.f32 1.0, %v1472
    %v1474 = vmul.f32 %v1471, %v1473
    %v1475 = vadd.f32 %v1471, %v1474
    %vm1476 = vweird.f32 %v1470
    %vm1477 = vweird.f32 %v1471
    %vm1478 = vmor %vm1476, %vm1477
    %v1479 = vsel %vm1478, %v1471, %v1475
    %v1480 = vand.u32 2147483647, %v1470
    %vm1481 = vcmp.eq.f32.partialorder %v1480, 8.507059e+37
    %v1482 = vand.u32 %v1470, 2147483648
    %v1483 = vor.u32 1.1754944e-38, %v1482
    %v1484 = vsel %vm1481, %v1483, %v1479
    %v1485 = vmul.f32 1.0, %v1484
    %v1486 = vmul.f32 %v1465, %v1361
    %v1487 = vmul.f32 %v1446, %v1466
    %v1488 = vadd.f32 %v1486, %v1487
    %v1489 = vtanh.pop %v1488
    %v1490 = vmul.f32 %v1485, %v1489
    %s1491 = smul.u32 7, 4
    %s1492 = smul.addr %s1491, 8
    %s1493 = scalar_lea.vmem [#allocation2], %s1492
    %v1494 = vld [vmem:[%s1493] sm:$0xff]
    %v1495 = vld [vmem:[%s1493 + $0x8] sm:$0xff]
    %v1496 = vld [vmem:[%s1493 + $0x10] sm:$0xff]
    %v1497 = vld [vmem:[%s1493 + $0x18] sm:$0xff]
    %v1498 = vpack.c.bf16 %v1490, %v1490
    %1499 = vmatpush.bf16.msra.mxu0 %v574
    %1500 = vmatpush.bf16.msra.mxu0 %v570
    %1501 = vmatpush.bf16.msra.mxu0 %v566
    %1502 = vmatpush.bf16.msra.mxu0 %v562
    %1503 = vmatpush.bf16.msra.mxu0 %v558
    %1504 = vmatpush.bf16.msra.mxu0 %v554
    %1505 = vmatpush.bf16.msra.mxu0 %v550
    %1506 = vmatpush.bf16.msra.mxu0 %v546
    %1507 = vmatmul.bf16.gmra.mxu0 %v1498
    %v1508 = vpop.f32.mrf.mxu0
    %v1509 = vadd.f32 0.0, %v1508
    %v1510 = vpop.f32.mrf.mxu0
    %1511 = vdwg.mxu0
    %1512 = vmatpush.bf16.msra.mxu0 %v575
    %1513 = vmatpush.bf16.msra.mxu0 %v571
    %1514 = vmatpush.bf16.msra.mxu0 %v567
    %1515 = vmatpush.bf16.msra.mxu0 %v563
    %1516 = vmatpush.bf16.msra.mxu0 %v559
    %1517 = vmatpush.bf16.msra.mxu0 %v555
    %1518 = vmatpush.bf16.msra.mxu0 %v551
    %1519 = vmatpush.bf16.msra.mxu0 %v547
    %1520 = vmatmul.bf16.gmra.mxu0 %v1498
    %v1521 = vpop.f32.mrf.mxu0
    %v1522 = vadd.f32 0.0, %v1521
    %v1523 = vpop.f32.mrf.mxu0
    %1524 = vdwg.mxu0
    %1525 = vmatpush.bf16.msra.mxu0 %v576
    %1526 = vmatpush.bf16.msra.mxu0 %v572
    %1527 = vmatpush.bf16.msra.mxu0 %v568
    %1528 = vmatpush.bf16.msra.mxu0 %v564
    %1529 = vmatpush.bf16.msra.mxu0 %v560
    %1530 = vmatpush.bf16.msra.mxu0 %v556
    %1531 = vmatpush.bf16.msra.mxu0 %v552
    %1532 = vmatpush.bf16.msra.mxu0 %v548
    %1533 = vmatmul.bf16.gmra.mxu0 %v1498
    %v1534 = vpop.f32.mrf.mxu0
    %v1535 = vadd.f32 0.0, %v1534
    %v1536 = vpop.f32.mrf.mxu0
    %1537 = vdwg.mxu0
    %1538 = vmatpush.bf16.msra.mxu0 %v577
    %1539 = vmatpush.bf16.msra.mxu0 %v573
    %1540 = vmatpush.bf16.msra.mxu0 %v569
    %1541 = vmatpush.bf16.msra.mxu0 %v565
    %1542 = vmatpush.bf16.msra.mxu0 %v561
    %1543 = vmatpush.bf16.msra.mxu0 %v557
    %1544 = vmatpush.bf16.msra.mxu0 %v553
    %1545 = vmatpush.bf16.msra.mxu0 %v549
    %1546 = vmatmul.bf16.gmra.mxu0 %v1498
    %v1547 = vpop.f32.mrf.mxu0
    %v1548 = vadd.f32 0.0, %v1547
    %v1549 = vpop.f32.mrf.mxu0
    %1550 = vdwg.mxu0
    %v1551 = vadd.f32 %v1494, %v1509
    %v1552 = vadd.f32 %v1495, %v1522
    %v1553 = vadd.f32 %v1496, %v1535
    %v1554 = vadd.f32 %v1497, %v1548
    %v1555 = vxor.u32 %v1551, 2147483648
    %v1556 = vmul.f32 %v1555, 1.442695
    %v1557 = vpow.pop %v1556
    %v1558 = vadd.f32 %v1557, 1.0
    %v1559 = vrcp.pop %v1558
    %v1560 = vmul.f32 %v1558, %v1559
    %v1561 = vsub.f32 1.0, %v1560
    %v1562 = vmul.f32 %v1559, %v1561
    %v1563 = vadd.f32 %v1559, %v1562
    %vm1564 = vweird.f32 %v1558
    %vm1565 = vweird.f32 %v1559
    %vm1566 = vmor %vm1564, %vm1565
    %v1567 = vsel %vm1566, %v1559, %v1563
    %v1568 = vand.u32 2147483647, %v1558
    %vm1569 = vcmp.eq.f32.partialorder %v1568, 8.507059e+37
    %v1570 = vand.u32 %v1558, 2147483648
    %v1571 = vor.u32 1.1754944e-38, %v1570
    %v1572 = vsel %vm1569, %v1571, %v1567
    %v1573 = vmul.f32 1.0, %v1572
    %v1574 = vxor.u32 %v1552, 2147483648
    %v1575 = vmul.f32 %v1574, 1.442695
    %v1576 = vpow.pop %v1575
    %v1577 = vadd.f32 %v1576, 1.0
    %v1578 = vrcp.pop %v1577
    %v1579 = vmul.f32 %v1577, %v1578
    %v1580 = vsub.f32 1.0, %v1579
    %v1581 = vmul.f32 %v1578, %v1580
    %v1582 = vadd.f32 %v1578, %v1581
    %vm1583 = vweird.f32 %v1577
    %vm1584 = vweird.f32 %v1578
    %vm1585 = vmor %vm1583, %vm1584
    %v1586 = vsel %vm1585, %v1578, %v1582
    %v1587 = vand.u32 2147483647, %v1577
    %vm1588 = vcmp.eq.f32.partialorder %v1587, 8.507059e+37
    %v1589 = vand.u32 %v1577, 2147483648
    %v1590 = vor.u32 1.1754944e-38, %v1589
    %v1591 = vsel %vm1588, %v1590, %v1586
    %v1592 = vmul.f32 1.0, %v1591
    %v1593 = vtanh.pop %v1553
    %v1594 = vxor.u32 %v1554, 2147483648
    %v1595 = vmul.f32 %v1594, 1.442695
    %v1596 = vpow.pop %v1595
    %v1597 = vadd.f32 %v1596, 1.0
    %v1598 = vrcp.pop %v1597
    %v1599 = vmul.f32 %v1597, %v1598
    %v1600 = vsub.f32 1.0, %v1599
    %v1601 = vmul.f32 %v1598, %v1600
    %v1602 = vadd.f32 %v1598, %v1601
    %vm1603 = vweird.f32 %v1597
    %vm1604 = vweird.f32 %v1598
    %vm1605 = vmor %vm1603, %vm1604
    %v1606 = vsel %vm1605, %v1598, %v1602
    %v1607 = vand.u32 2147483647, %v1597
    %vm1608 = vcmp.eq.f32.partialorder %v1607, 8.507059e+37
    %v1609 = vand.u32 %v1597, 2147483648
    %v1610 = vor.u32 1.1754944e-38, %v1609
    %v1611 = vsel %vm1608, %v1610, %v1606
    %v1612 = vmul.f32 1.0, %v1611
    %v1613 = vmul.f32 %v1592, %v1488
    %v1614 = vmul.f32 %v1573, %v1593
    %v1615 = vadd.f32 %v1613, %v1614
    %v1616 = vtanh.pop %v1615
    %v1617 = vmul.f32 %v1612, %v1616
    %1618 = vst [vmem:[%s4] sm:$0xff] %v1617
    %1619 = vst [vmem:[#allocation3] sm:$0xff] %v1615
    // Predicated region
    $region22: #{model_forward.1} parent=1 // pred_check
      _
    $region23: #{model_forward.1} parent=1 // pred_check_branch
      %1621 = sbr.rel (0) target = $region25
    $region24: #{model_forward.1} parent=1 // pred_region
      _
    $region25: #{model_forward.1} parent=1 // pred_fallthru
      _
    // Predicated region
    $region26: #{model_forward.1} parent=1 // pred_check
      _
    $region27: #{model_forward.1} parent=1 // pred_check_branch
      %1623 = sbr.rel (0) target = $region29
    $region28: #{model_forward.1} parent=1 // pred_region
      %1625 = vsyncadd [#allocation4], 0
      %s1627 = sshll.u32 [#allocation3], 4
      %s1628 = int_to_ptr.vmem [resolvable:$true] %s1627
      %s1629 = sshll.u32 %s5, 4
      %s1630 = int_to_ptr.hbm [resolvable:$true] %s1629
      %1632 = dma.vmem_to_hbm [thread:$0]  %s1628, 128, %s1630, [#allocation4]
    $region29: #{model_forward.1} parent=1 // pred_fallthru
      _
    // Predicated region
    $region30: #{model_forward.1} parent=1 // pred_check
      _
    $region31: #{model_forward.1} parent=1 // pred_check_branch
      %1634 = sbr.rel (0) target = $region33
    $region32: #{model_forward.1} parent=1 // pred_region
      _
    $region33: #{model_forward.1} parent=1 // pred_fallthru
      _
    // Predicated region
    $region34: #{model_forward.1} parent=1 // pred_check
      _
    $region35: #{model_forward.1} parent=1 // pred_check_branch
      %1636 = sbr.rel (0) target = $region37
    $region36: #{model_forward.1} parent=1 // pred_region
      %1638 = dma.done [#allocation4], 128
    $region37: #{model_forward.1} parent=1 // pred_fallthru
      _
    %1639 = vsyncpa [#allocation4], 1

</llo_original>
